<compile_context>
chip_gen: v6e
topology: v6e:2x2x1
jax: 0.10.0
libtpu: 0.0.40
codegen_flags: <defaults>
</compile_context>

<pallas_src>
import jax
import jax.numpy as jnp
from jax.experimental import pallas as pl
from jax.experimental.pallas import tpu as pltpu


LANE = 128        # vreg lane width / MXU-friendly channel padding
ROW_TILE = 256    # node rows per grid step (sized for v7x 64 MiB VMEM)


def _round_up(x, m):
    return ((x + m - 1) // m) * m


def _pad2(a, rows, cols):
    return jnp.pad(a, ((0, rows - a.shape[0]), (0, cols - a.shape[1])))


# ----------------------------- glue (plain JAX) -----------------------------

def gcn_norm_dense(edge_index, edge_weight, num_nodes):
    """Dense symmetrically-normalized adjacency with self-loops."""
    src = edge_index[0]
    dst = edge_index[1]
    loop = jnp.arange(num_nodes, dtype=src.dtype)
    src = jnp.concatenate([src, loop])
    dst = jnp.concatenate([dst, loop])
    w = jnp.concatenate(
        [edge_weight.astype(jnp.float32),
         jnp.ones((num_nodes,), dtype=jnp.float32)])
    deg = jnp.zeros((num_nodes,), jnp.float32).at[dst].add(w)
    dinv = jnp.where(deg > 0, 1.0 / jnp.sqrt(deg), 0.0)
    norm = dinv[src] * w * dinv[dst]
    # aggregation out[dst] += norm * x[src]  =>  A_hat[dst, src] = norm
    a_hat = jnp.zeros((num_nodes, num_nodes), jnp.float32).at[dst, src].add(norm)
    return a_hat


# ------------------------------ Pallas kernels -------------------------------

def _layer1_kernel(a_ref, x_ref, w1_ref, b1_ref, h_ref):
    # Aggregate first on the narrow channel side, then transform:
    #   h = relu((A_tile @ X) @ W1 + b1)
    ax = jnp.dot(a_ref[...], x_ref[...], preferred_element_type=jnp.float32)
    h = jnp.dot(ax.astype(jnp.bfloat16), w1_ref[...],
                preferred_element_type=jnp.float32) + b1_ref[...]
    h_ref[...] = jnp.maximum(h, 0.0).astype(h_ref.dtype)


def _layer23_kernel(a_ref, h_ref, w23_ref, b23_ref, o_ref):
    # Compute A_tile @ h once, then one fused matmul with [W2 | W3]:
    #   [mean | logstd] = (A_tile @ h) @ [W2|W3] + [b2|b3]
    ah = jnp.dot(a_ref[...], h_ref[...], preferred_element_type=jnp.float32)
    o_ref[...] = (jnp.dot(ah.astype(jnp.bfloat16), w23_ref[...],
                          preferred_element_type=jnp.float32) + b23_ref[...])


# ------------------------------- forward pass --------------------------------

def graph_encoder_forward(x, edge_index, edge_weight, params):
    w1, b1, w2, b2, w3, b3 = params
    n, c_in = x.shape
    hidden = w1.shape[1]
    out_c = w2.shape[1]

    tm = ROW_TILE
    n_pad = max(tm, _round_up(n, tm))
    cin_p = _round_up(c_in, LANE)
    hid_p = _round_up(hidden, LANE)
    o2_p = _round_up(2 * out_c, LANE)
    grid_rows = n_pad // tm

    # dense normalized adjacency (zero-padded rows/cols are harmless:
    # padded A columns are zero so garbage padded h rows never contribute)
    a_hat = gcn_norm_dense(edge_index, edge_weight, n)
    a_p = _pad2(a_hat, n_pad, n_pad).astype(jnp.bfloat16)
    x_p = _pad2(x.astype(jnp.float32), n_pad, cin_p).astype(jnp.bfloat16)

    w1_p = _pad2(w1, cin_p, hid_p).astype(jnp.bfloat16)
    b1_p = _pad2(b1.reshape(1, -1), 1, hid_p).astype(jnp.float32)
    w23_p = _pad2(jnp.concatenate([w2, w3], axis=1), hid_p, o2_p).astype(jnp.bfloat16)
    b23_p = _pad2(jnp.concatenate([b2, b3]).reshape(1, -1), 1, o2_p).astype(jnp.float32)

    cparams = pltpu.CompilerParams(
        dimension_semantics=("parallel",),
        vmem_limit_bytes=48 * 1024 * 1024)

    # phase 1: row-tiled  h = relu((A @ X) @ W1 + b1)
    h_p = pl.pallas_call(
        _layer1_kernel,
        out_shape=jax.ShapeDtypeStruct((n_pad, hid_p), jnp.bfloat16),
        grid=(grid_rows,),
        in_specs=[
            pl.BlockSpec((tm, n_pad), lambda i: (i, 0)),      # A row tile (pipelined)
            pl.BlockSpec((n_pad, cin_p), lambda i: (0, 0)),   # X resident
            pl.BlockSpec((cin_p, hid_p), lambda i: (0, 0)),   # W1 resident
            pl.BlockSpec((1, hid_p), lambda i: (0, 0)),       # b1 resident
        ],
        out_specs=pl.BlockSpec((tm, hid_p), lambda i: (i, 0)),
        compiler_params=cparams,
    )(a_p, x_p, w1_p, b1_p)

    # phase 2: row-tiled  [mean | logstd] = (A @ h) @ [W2|W3] + [b2|b3]
    out_p = pl.pallas_call(
        _layer23_kernel,
        out_shape=jax.ShapeDtypeStruct((n_pad, o2_p), jnp.float32),
        grid=(grid_rows,),
        in_specs=[
            pl.BlockSpec((tm, n_pad), lambda i: (i, 0)),      # A row tile (pipelined)
            pl.BlockSpec((n_pad, hid_p), lambda i: (0, 0)),   # h resident
            pl.BlockSpec((hid_p, o2_p), lambda i: (0, 0)),    # [W2|W3] resident
            pl.BlockSpec((1, o2_p), lambda i: (0, 0)),        # [b2|b3] resident
        ],
        out_specs=pl.BlockSpec((tm, o2_p), lambda i: (i, 0)),
        compiler_params=cparams,
    )(a_p, h_p, w23_p, b23_p)

    mean = out_p[:n, :out_c]
    logstd = out_p[:n, out_c:2 * out_c]
    return mean, logstd


# -------------------------- deterministic parameters -------------------------

def init_params(key, in_channels, hidden_channels, out_channels):
    k1, k2, k3 = jax.random.split(key, 3)

    def glorot(k, fan_in, fan_out):
        lim = jnp.sqrt(6.0 / (fan_in + fan_out))
        return jax.random.uniform(k, (fan_in, fan_out), jnp.float32, -lim, lim)

    w1 = glorot(k1, in_channels, hidden_channels)
    b1 = jnp.zeros((hidden_channels,), jnp.float32)
    w2 = glorot(k2, hidden_channels, out_channels)
    b2 = jnp.zeros((out_channels,), jnp.float32)
    w3 = glorot(k3, hidden_channels, out_channels)
    b3 = jnp.zeros((out_channels,), jnp.float32)
    return (w1, b1, w2, b2, w3, b3)


# ------------------------------------ main -----------------------------------

if __name__ == "__main__":
    key = jax.random.PRNGKey(0)
    k_x, k_e, k_w, k_p = jax.random.split(key, 4)

    num_nodes = 16
    num_edges = 40
    in_channels, hidden_channels, out_channels = 8, 32, 16

    x = jax.random.normal(k_x, (num_nodes, in_channels), jnp.float32)
    edge_index = jax.random.randint(k_e, (2, num_edges), 0, num_nodes, jnp.int32)
    edge_weight = jax.random.uniform(k_w, (num_edges,), jnp.float32, 0.1, 1.0)

    params = init_params(k_p, in_channels, hidden_channels, out_channels)

    mean, logstd = jax.jit(graph_encoder_forward)(x, edge_index, edge_weight, params)
    jax.block_until_ready((mean, logstd))

    # pure-JAX f32 reference (kernel uses bf16 MXU operands -> loose tolerance)
    a_hat = gcn_norm_dense(edge_index, edge_weight, num_nodes)
    w1, b1, w2, b2, w3, b3 = params
    h_ref = jnp.maximum(a_hat @ (x @ w1) + b1, 0.0)
    mean_ref = a_hat @ (h_ref @ w2) + b2
    logstd_ref = a_hat @ (h_ref @ w3) + b3
    assert mean.shape == (num_nodes, out_channels)
    assert logstd.shape == (num_nodes, out_channels)
    assert jnp.allclose(mean, mean_ref, atol=1e-1, rtol=1e-1)
    assert jnp.allclose(logstd, logstd_ref, atol=1e-1, rtol=1e-1)

    print("KERNEL_OK")
</pallas_src>

<mosaic_0001>
module attributes {stable_mosaic.version = 11 : i64} {
  func.func private @main(%arg0: i32) attributes {dimension_semantics = [#tpu.dimension_semantics<core_parallel>], iteration_bounds = array<i64: 2>, tpu.core_type = #tpu.core_type<sc_scalar_subcore>, window_params = []} {
    return
  }
}

module attributes {stable_mosaic.version = 11 : i64} {
  func.func private @main(%arg0: i32) attributes {dimension_semantics = [#tpu.dimension_semantics<core_parallel>], iteration_bounds = array<i64: 2>, tpu.core_type = #tpu.core_type<sc_scalar_subcore>, window_params = []} {
    return
  }
}

module attributes {stable_mosaic.version = 11 : i64} {
  func.func @_layer1_kernel(%arg0: i32, %arg1: memref<256x256xbf16, #tpu.memory_space<vmem>>, %arg2: memref<256x128xbf16, #tpu.memory_space<vmem>>, %arg3: memref<128x128xbf16, #tpu.memory_space<vmem>>, %arg4: memref<1x128xf32, #tpu.memory_space<vmem>>, %arg5: memref<256x128xbf16, #tpu.memory_space<vmem>>) attributes {dimension_semantics = [#tpu.dimension_semantics<parallel>], iteration_bounds = array<i64: 1>, scalar_prefetch = 0 : i64, scratch_operands = 0 : i64, tpu.core_type = #tpu.core_type<tc>, window_params = [{transform_indices = @transform_0, window_bounds = array<i64: 256, 256>}, {pipeline_mode = #tpu.pipeline_mode<synchronous>, transform_indices = @transform_1, window_bounds = array<i64: 256, 128>}, {pipeline_mode = #tpu.pipeline_mode<synchronous>, transform_indices = @transform_2, window_bounds = array<i64: 128, 128>}, {pipeline_mode = #tpu.pipeline_mode<synchronous>, transform_indices = @transform_3, window_bounds = array<i64: 1, 128>}, {transform_indices = @transform_4, window_bounds = array<i64: 256, 128>}]} {
    %c0 = arith.constant 0 : index
    %c0_0 = arith.constant 0 : index
    %0 = vector.load %arg1[%c0, %c0_0] : memref<256x256xbf16, #tpu.memory_space<vmem>>, vector<256x256xbf16>
    %c0_1 = arith.constant 0 : index
    %c0_2 = arith.constant 0 : index
    %1 = vector.load %arg2[%c0_1, %c0_2] : memref<256x128xbf16, #tpu.memory_space<vmem>>, vector<256x128xbf16>
    %cst = arith.constant dense<0.000000e+00> : vector<256x128xf32>
    %2 = tpu.matmul %0, %1, %cst {dimension_numbers = #tpu.dot_dimension_numbers<[1], [0], [0], [1], [0, 0, 1, 1], [], []>} : vector<256x256xbf16>, vector<256x128xbf16>, vector<256x128xf32> -> vector<256x128xf32>
    %3 = arith.truncf %2 : vector<256x128xf32> to vector<256x128xbf16>
    %c0_3 = arith.constant 0 : index
    %c0_4 = arith.constant 0 : index
    %4 = vector.load %arg3[%c0_3, %c0_4] : memref<128x128xbf16, #tpu.memory_space<vmem>>, vector<128x128xbf16>
    %cst_5 = arith.constant dense<0.000000e+00> : vector<256x128xf32>
    %5 = tpu.matmul %3, %4, %cst_5 {dimension_numbers = #tpu.dot_dimension_numbers<[1], [0], [0], [1], [0, 0, 1, 1], [], []>} : vector<256x128xbf16>, vector<128x128xbf16>, vector<256x128xf32> -> vector<256x128xf32>
    %c0_6 = arith.constant 0 : index
    %c0_7 = arith.constant 0 : index
    %6 = vector.load %arg4[%c0_6, %c0_7] : memref<1x128xf32, #tpu.memory_space<vmem>>, vector<1x128xf32>
    %7 = vector.broadcast %6 : vector<1x128xf32> to vector<256x128xf32>
    %8 = arith.addf %5, %7 : vector<256x128xf32>
    %cst_8 = arith.constant 0.000000e+00 : f32
    %9 = vector.broadcast %cst_8 : f32 to vector<256x128xf32>
    %10 = arith.maximumf %8, %9 : vector<256x128xf32>
    %11 = arith.truncf %10 : vector<256x128xf32> to vector<256x128xbf16>
    %c0_9 = arith.constant 0 : index
    %c0_10 = arith.constant 0 : index
    %12 = vector.load %arg5[%c0_9, %c0_10] : memref<256x128xbf16, #tpu.memory_space<vmem>>, vector<256x128xbf16>
    tpu.vector_store %arg5[%c0_9, %c0_10], %11 {strides = array<i32>} : memref<256x128xbf16, #tpu.memory_space<vmem>>, vector<256x128xbf16>,
    return
  }
  func.func @transform_0(%arg0: i32) -> (i32, i32) {
    %c0_i32 = arith.constant 0 : i32
    %c0_i32_0 = arith.constant 0 : i32
    return %arg0, %c0_i32 : i32, i32
  }
  func.func @transform_1(%arg0: i32) -> (i32, i32) {
    %c0_i32 = arith.constant 0 : i32
    %c0_i32_0 = arith.constant 0 : i32
    %c0_i32_1 = arith.constant 0 : i32
    return %c0_i32, %c0_i32_0 : i32, i32
  }
  func.func @transform_2(%arg0: i32) -> (i32, i32) {
    %c0_i32 = arith.constant 0 : i32
    %c0_i32_0 = arith.constant 0 : i32
    %c0_i32_1 = arith.constant 0 : i32
    return %c0_i32, %c0_i32_0 : i32, i32
  }
  func.func @transform_3(%arg0: i32) -> (i32, i32) {
    %c0_i32 = arith.constant 0 : i32
    %c0_i32_0 = arith.constant 0 : i32
    %c0_i32_1 = arith.constant 0 : i32
    return %c0_i32, %c0_i32_0 : i32, i32
  }
  func.func @transform_4(%arg0: i32) -> (i32, i32) {
    %c0_i32 = arith.constant 0 : i32
    %c0_i32_0 = arith.constant 0 : i32
    return %arg0, %c0_i32 : i32, i32
  }
}

module attributes {stable_mosaic.version = 11 : i64} {
  func.func @_layer23_kernel(%arg0: i32, %arg1: memref<256x256xbf16, #tpu.memory_space<vmem>>, %arg2: memref<256x128xbf16, #tpu.memory_space<vmem>>, %arg3: memref<128x128xbf16, #tpu.memory_space<vmem>>, %arg4: memref<1x128xf32, #tpu.memory_space<vmem>>, %arg5: memref<256x128xf32, #tpu.memory_space<vmem>>) attributes {dimension_semantics = [#tpu.dimension_semantics<parallel>], iteration_bounds = array<i64: 1>, scalar_prefetch = 0 : i64, scratch_operands = 0 : i64, tpu.core_type = #tpu.core_type<tc>, window_params = [{transform_indices = @transform_0, window_bounds = array<i64: 256, 256>}, {pipeline_mode = #tpu.pipeline_mode<synchronous>, transform_indices = @transform_1, window_bounds = array<i64: 256, 128>}, {pipeline_mode = #tpu.pipeline_mode<synchronous>, transform_indices = @transform_2, window_bounds = array<i64: 128, 128>}, {pipeline_mode = #tpu.pipeline_mode<synchronous>, transform_indices = @transform_3, window_bounds = array<i64: 1, 128>}, {transform_indices = @transform_4, window_bounds = array<i64: 256, 128>}]} {
    %c0 = arith.constant 0 : index
    %c0_0 = arith.constant 0 : index
    %0 = vector.load %arg1[%c0, %c0_0] : memref<256x256xbf16, #tpu.memory_space<vmem>>, vector<256x256xbf16>
    %c0_1 = arith.constant 0 : index
    %c0_2 = arith.constant 0 : index
    %1 = vector.load %arg2[%c0_1, %c0_2] : memref<256x128xbf16, #tpu.memory_space<vmem>>, vector<256x128xbf16>
    %cst = arith.constant dense<0.000000e+00> : vector<256x128xf32>
    %2 = tpu.matmul %0, %1, %cst {dimension_numbers = #tpu.dot_dimension_numbers<[1], [0], [0], [1], [0, 0, 1, 1], [], []>} : vector<256x256xbf16>, vector<256x128xbf16>, vector<256x128xf32> -> vector<256x128xf32>
    %3 = arith.truncf %2 : vector<256x128xf32> to vector<256x128xbf16>
    %c0_3 = arith.constant 0 : index
    %c0_4 = arith.constant 0 : index
    %4 = vector.load %arg3[%c0_3, %c0_4] : memref<128x128xbf16, #tpu.memory_space<vmem>>, vector<128x128xbf16>
    %cst_5 = arith.constant dense<0.000000e+00> : vector<256x128xf32>
    %5 = tpu.matmul %3, %4, %cst_5 {dimension_numbers = #tpu.dot_dimension_numbers<[1], [0], [0], [1], [0, 0, 1, 1], [], []>} : vector<256x128xbf16>, vector<128x128xbf16>, vector<256x128xf32> -> vector<256x128xf32>
    %c0_6 = arith.constant 0 : index
    %c0_7 = arith.constant 0 : index
    %6 = vector.load %arg4[%c0_6, %c0_7] : memref<1x128xf32, #tpu.memory_space<vmem>>, vector<1x128xf32>
    %7 = vector.broadcast %6 : vector<1x128xf32> to vector<256x128xf32>
    %8 = arith.addf %5, %7 : vector<256x128xf32>
    %c0_8 = arith.constant 0 : index
    %c0_9 = arith.constant 0 : index
    %9 = vector.load %arg5[%c0_8, %c0_9] : memref<256x128xf32, #tpu.memory_space<vmem>>, vector<256x128xf32>
    tpu.vector_store %arg5[%c0_8, %c0_9], %8 {strides = array<i32>} : memref<256x128xf32, #tpu.memory_space<vmem>>, vector<256x128xf32>,
    return
  }
  func.func @transform_0(%arg0: i32) -> (i32, i32) {
    %c0_i32 = arith.constant 0 : i32
    %c0_i32_0 = arith.constant 0 : i32
    return %arg0, %c0_i32 : i32, i32
  }
  func.func @transform_1(%arg0: i32) -> (i32, i32) {
    %c0_i32 = arith.constant 0 : i32
    %c0_i32_0 = arith.constant 0 : i32
    %c0_i32_1 = arith.constant 0 : i32
    return %c0_i32, %c0_i32_0 : i32, i32
  }
  func.func @transform_2(%arg0: i32) -> (i32, i32) {
    %c0_i32 = arith.constant 0 : i32
    %c0_i32_0 = arith.constant 0 : i32
    %c0_i32_1 = arith.constant 0 : i32
    return %c0_i32, %c0_i32_0 : i32, i32
  }
  func.func @transform_3(%arg0: i32) -> (i32, i32) {
    %c0_i32 = arith.constant 0 : i32
    %c0_i32_0 = arith.constant 0 : i32
    %c0_i32_1 = arith.constant 0 : i32
    return %c0_i32, %c0_i32_0 : i32, i32
  }
  func.func @transform_4(%arg0: i32) -> (i32, i32) {
    %c0_i32 = arith.constant 0 : i32
    %c0_i32_0 = arith.constant 0 : i32
    return %arg0, %c0_i32 : i32, i32
  }
}

</mosaic_0001>

<llo_original>
// kernel: graph_encoder_forward.3
$region0: #{graph_encoder_forward.3}
  #allocation0 [shape = 'u32[]', space=smem, size = 0x4, offset = 0x4, fixed_abs, tag = 'smem constant byte address 0x4 - core index']
  #allocation1 [shape = 'u32[144,128]{1,0:T(1,128)}', space=vmem, size = 0x12000, scoped, tag = 'internal scratch']
  %s0 = inlined_call_operand.vmem [shape: bf16[256,256], index: 0, kind: input, shape index: {}]
  %s1 = inlined_call_operand.vmem [shape: bf16[256,128], index: 1, kind: input, shape index: {}]
  %s2 = inlined_call_operand.vmem [shape: bf16[128,128], index: 2, kind: input, shape index: {}]
  %s3 = inlined_call_operand.vmem [shape: f32[1,128], index: 3, kind: input, shape index: {}]
  %s4 = inlined_call_operand.vmem [shape: f32[256,128], index: 4, kind: output, shape index: {}]
  %s5 = sld [smem:[#allocation0]]
  $region26: #{graph_encoder_forward.3} parent=0
    _
  %s7 = ssub.s32 1, %s5
  %s8 = scalar_select 0, %s7, %s5
  // Predicated region
  $region2: #{graph_encoder_forward.3} parent=0 // pred_check
    _
  $region3: #{graph_encoder_forward.3} parent=0 // pred_check_branch
    %10 = sbr.rel (0) target = $region5
  $region4: #{graph_encoder_forward.3} parent=0 // pred_region
    _
  $region5: #{graph_encoder_forward.3} parent=0 // pred_fallthru
    _
  // Predicated region
  $region6: #{graph_encoder_forward.3} parent=0 // pred_check
    _
  $region7: #{graph_encoder_forward.3} parent=0 // pred_check_branch
    %12 = sbr.rel (0) target = $region9
  $region8: #{graph_encoder_forward.3} parent=0 // pred_region
    _
  $region9: #{graph_encoder_forward.3} parent=0 // pred_fallthru
    _
  // Predicated region
  $region10: #{graph_encoder_forward.3} parent=0 // pred_check
    _
  $region11: #{graph_encoder_forward.3} parent=0 // pred_check_branch
    %14 = sbr.rel (0) target = $region13
  $region12: #{graph_encoder_forward.3} parent=0 // pred_region
    _
  $region13: #{graph_encoder_forward.3} parent=0 // pred_fallthru
    _
  // Predicated region
  $region14: #{graph_encoder_forward.3} parent=0 // pred_check
    _
  $region15: #{graph_encoder_forward.3} parent=0 // pred_check_branch
    %16 = sbr.rel (0) target = $region17
  $region16: #{graph_encoder_forward.3} parent=0 // pred_region
    _
  $region17: #{graph_encoder_forward.3} parent=0 // pred_fallthru
    _
  %v18 = vld [vmem:[%s0] sm:$0xff]
  %v19 = vld [vmem:[%s0 + $0x8] sm:$0xff]
  %v20 = vld [vmem:[%s0 + $0x10] sm:$0xff]
  %v21 = vld [vmem:[%s0 + $0x18] sm:$0xff]
  %v22 = vld [vmem:[%s0 + $0x20] sm:$0xff]
  %v23 = vld [vmem:[%s0 + $0x28] sm:$0xff]
  %v24 = vld [vmem:[%s0 + $0x30] sm:$0xff]
  %v25 = vld [vmem:[%s0 + $0x38] sm:$0xff]
  %v26 = vld [vmem:[%s0 + $0x40] sm:$0xff]
  %v27 = vld [vmem:[%s0 + $0x48] sm:$0xff]
  %v28 = vld [vmem:[%s0 + $0x50] sm:$0xff]
  %v29 = vld [vmem:[%s0 + $0x58] sm:$0xff]
  %v30 = vld [vmem:[%s0 + $0x60] sm:$0xff]
  %v31 = vld [vmem:[%s0 + $0x68] sm:$0xff]
  %v32 = vld [vmem:[%s0 + $0x70] sm:$0xff]
  %v33 = vld [vmem:[%s0 + $0x78] sm:$0xff]
  %v34 = vld [vmem:[%s0 + $0x80] sm:$0xff]
  %v35 = vld [vmem:[%s0 + $0x88] sm:$0xff]
  %v36 = vld [vmem:[%s0 + $0x90] sm:$0xff]
  %v37 = vld [vmem:[%s0 + $0x98] sm:$0xff]
  %v38 = vld [vmem:[%s0 + $0xa0] sm:$0xff]
  %v39 = vld [vmem:[%s0 + $0xa8] sm:$0xff]
  %v40 = vld [vmem:[%s0 + $0xb0] sm:$0xff]
  %v41 = vld [vmem:[%s0 + $0xb8] sm:$0xff]
  %v42 = vld [vmem:[%s0 + $0xc0] sm:$0xff]
  %v43 = vld [vmem:[%s0 + $0xc8] sm:$0xff]
  %v44 = vld [vmem:[%s0 + $0xd0] sm:$0xff]
  %v45 = vld [vmem:[%s0 + $0xd8] sm:$0xff]
  %v46 = vld [vmem:[%s0 + $0xe0] sm:$0xff]
  %v47 = vld [vmem:[%s0 + $0xe8] sm:$0xff]
  %v48 = vld [vmem:[%s0 + $0xf0] sm:$0xff]
  %v49 = vld [vmem:[%s0 + $0xf8] sm:$0xff]
  %v50 = vld [vmem:[%s1] sm:$0xf]
  %v51 = vld [vmem:[%s1 + $0x4] sm:$0xf]
  %v52 = vld [vmem:[%s1 + $0x8] sm:$0xf]
  %v53 = vld [vmem:[%s1 + $0xc] sm:$0xf]
  %v54 = vld [vmem:[%s1 + $0x10] sm:$0xf]
  %v55 = vld [vmem:[%s1 + $0x14] sm:$0xf]
  %v56 = vld [vmem:[%s1 + $0x18] sm:$0xf]
  %v57 = vld [vmem:[%s1 + $0x1c] sm:$0xf]
  %v58 = vld [vmem:[%s1 + $0x20] sm:$0xf]
  %v59 = vld [vmem:[%s1 + $0x24] sm:$0xf]
  %v60 = vld [vmem:[%s1 + $0x28] sm:$0xf]
  %v61 = vld [vmem:[%s1 + $0x2c] sm:$0xf]
  %v62 = vld [vmem:[%s1 + $0x30] sm:$0xf]
  %v63 = vld [vmem:[%s1 + $0x34] sm:$0xf]
  %v64 = vld [vmem:[%s1 + $0x38] sm:$0xf]
  %v65 = vld [vmem:[%s1 + $0x3c] sm:$0xf]
  %v66 = vld [vmem:[%s1 + $0x40] sm:$0xf]
  %v67 = vld [vmem:[%s1 + $0x44] sm:$0xf]
  %v68 = vld [vmem:[%s1 + $0x48] sm:$0xf]
  %v69 = vld [vmem:[%s1 + $0x4c] sm:$0xf]
  %v70 = vld [vmem:[%s1 + $0x50] sm:$0xf]
  %v71 = vld [vmem:[%s1 + $0x54] sm:$0xf]
  %v72 = vld [vmem:[%s1 + $0x58] sm:$0xf]
  %v73 = vld [vmem:[%s1 + $0x5c] sm:$0xf]
  %v74 = vld [vmem:[%s1 + $0x60] sm:$0xf]
  %v75 = vld [vmem:[%s1 + $0x64] sm:$0xf]
  %v76 = vld [vmem:[%s1 + $0x68] sm:$0xf]
  %v77 = vld [vmem:[%s1 + $0x6c] sm:$0xf]
  %v78 = vld [vmem:[%s1 + $0x70] sm:$0xf]
  %v79 = vld [vmem:[%s1 + $0x74] sm:$0xf]
  %v80 = vld [vmem:[%s1 + $0x78] sm:$0xf]
  %v81 = vld [vmem:[%s1 + $0x7c] sm:$0xf]
  %v114 = vunpack.c.l.b16 %v18
  %v115 = vunpack.c.h.b16 %v18
  %v116 = vunpack.c.l.b16 %v19
  %v117 = vunpack.c.h.b16 %v19
  %v118 = vunpack.c.l.b16 %v20
  %v119 = vunpack.c.h.b16 %v20
  %v120 = vunpack.c.l.b16 %v21
  %v121 = vunpack.c.h.b16 %v21
  %v122 = vunpack.c.l.b16 %v22
  %v123 = vunpack.c.h.b16 %v22
  %v124 = vunpack.c.l.b16 %v23
  %v125 = vunpack.c.h.b16 %v23
  %v126 = vunpack.c.l.b16 %v24
  %v127 = vunpack.c.h.b16 %v24
  %v128 = vunpack.c.l.b16 %v25
  %v129 = vunpack.c.h.b16 %v25
  %v130 = vunpack.c.l.b16 %v26
  %v131 = vunpack.c.h.b16 %v26
  %v132 = vunpack.c.l.b16 %v27
  %v133 = vunpack.c.h.b16 %v27
  %v134 = vunpack.c.l.b16 %v28
  %v135 = vunpack.c.h.b16 %v28
  %v136 = vunpack.c.l.b16 %v29
  %v137 = vunpack.c.h.b16 %v29
  %v138 = vunpack.c.l.b16 %v30
  %v139 = vunpack.c.h.b16 %v30
  %v140 = vunpack.c.l.b16 %v31
  %v141 = vunpack.c.h.b16 %v31
  %v142 = vunpack.c.l.b16 %v32
  %v143 = vunpack.c.h.b16 %v32
  %v144 = vunpack.c.l.b16 %v33
  %v145 = vunpack.c.h.b16 %v33
  %v146 = vunpack.c.l.b16 %v34
  %v147 = vunpack.c.h.b16 %v34
  %v148 = vunpack.c.l.b16 %v35
  %v149 = vunpack.c.h.b16 %v35
  %v150 = vunpack.c.l.b16 %v36
  %v151 = vunpack.c.h.b16 %v36
  %v152 = vunpack.c.l.b16 %v37
  %v153 = vunpack.c.h.b16 %v37
  %v154 = vunpack.c.l.b16 %v38
  %v155 = vunpack.c.h.b16 %v38
  %v156 = vunpack.c.l.b16 %v39
  %v157 = vunpack.c.h.b16 %v39
  %v158 = vunpack.c.l.b16 %v40
  %v159 = vunpack.c.h.b16 %v40
  %v160 = vunpack.c.l.b16 %v41
  %v161 = vunpack.c.h.b16 %v41
  %v162 = vunpack.c.l.b16 %v42
  %v163 = vunpack.c.h.b16 %v42
  %v164 = vunpack.c.l.b16 %v43
  %v165 = vunpack.c.h.b16 %v43
  %v166 = vunpack.c.l.b16 %v44
  %v167 = vunpack.c.h.b16 %v44
  %v168 = vunpack.c.l.b16 %v45
  %v169 = vunpack.c.h.b16 %v45
  %v170 = vunpack.c.l.b16 %v46
  %v171 = vunpack.c.h.b16 %v46
  %v172 = vunpack.c.l.b16 %v47
  %v173 = vunpack.c.h.b16 %v47
  %v174 = vunpack.c.l.b16 %v48
  %v175 = vunpack.c.h.b16 %v48
  %v176 = vunpack.c.l.b16 %v49
  %v177 = vunpack.c.h.b16 %v49
  %v178 = vpack.c.b16 %v116, %v114
  %v179 = vpack.c.b16 %v117, %v115
  %v180 = vpack.c.b16 %v120, %v118
  %v181 = vpack.c.b16 %v121, %v119
  %v182 = vpack.c.b16 %v124, %v122
  %v183 = vpack.c.b16 %v125, %v123
  %v184 = vpack.c.b16 %v128, %v126
  %v185 = vpack.c.b16 %v129, %v127
  %v186 = vpack.c.b16 %v132, %v130
  %v187 = vpack.c.b16 %v133, %v131
  %v188 = vpack.c.b16 %v136, %v134
  %v189 = vpack.c.b16 %v137, %v135
  %v190 = vpack.c.b16 %v140, %v138
  %v191 = vpack.c.b16 %v141, %v139
  %v192 = vpack.c.b16 %v144, %v142
  %v193 = vpack.c.b16 %v145, %v143
  %v194 = vpack.c.b16 %v148, %v146
  %v195 = vpack.c.b16 %v149, %v147
  %v196 = vpack.c.b16 %v152, %v150
  %v197 = vpack.c.b16 %v153, %v151
  %v198 = vpack.c.b16 %v156, %v154
  %v199 = vpack.c.b16 %v157, %v155
  %v200 = vpack.c.b16 %v160, %v158
  %v201 = vpack.c.b16 %v161, %v159
  %v202 = vpack.c.b16 %v164, %v162
  %v203 = vpack.c.b16 %v165, %v163
  %v204 = vpack.c.b16 %v168, %v166
  %v205 = vpack.c.b16 %v169, %v167
  %v206 = vpack.c.b16 %v172, %v170
  %v207 = vpack.c.b16 %v173, %v171
  %v208 = vpack.c.b16 %v176, %v174
  %v209 = vpack.c.b16 %v177, %v175
  %v274 = vunpack.c.l.b16 %v50
  %v275 = vunpack.c.l.b16 %v51
  %v276 = vunpack.c.l.b16 %v52
  %v277 = vunpack.c.l.b16 %v53
  %v278 = vunpack.c.l.b16 %v54
  %v279 = vunpack.c.l.b16 %v55
  %v280 = vunpack.c.l.b16 %v56
  %v281 = vunpack.c.l.b16 %v57
  %v282 = vunpack.c.l.b16 %v58
  %v283 = vunpack.c.l.b16 %v59
  %v284 = vunpack.c.l.b16 %v60
  %v285 = vunpack.c.l.b16 %v61
  %v286 = vunpack.c.l.b16 %v62
  %v287 = vunpack.c.l.b16 %v63
  %v288 = vunpack.c.l.b16 %v64
  %v289 = vunpack.c.l.b16 %v65
  %v290 = vunpack.c.l.b16 %v66
  %v291 = vunpack.c.l.b16 %v67
  %v292 = vunpack.c.l.b16 %v68
  %v293 = vunpack.c.l.b16 %v69
  %v294 = vunpack.c.l.b16 %v70
  %v295 = vunpack.c.l.b16 %v71
  %v296 = vunpack.c.l.b16 %v72
  %v297 = vunpack.c.l.b16 %v73
  %v298 = vunpack.c.l.b16 %v74
  %v299 = vunpack.c.l.b16 %v75
  %v300 = vunpack.c.l.b16 %v76
  %v301 = vunpack.c.l.b16 %v77
  %v302 = vunpack.c.l.b16 %v78
  %v303 = vunpack.c.l.b16 %v79
  %v304 = vunpack.c.l.b16 %v80
  %v305 = vunpack.c.l.b16 %v81
  %v306 = vpack.c.b16 %v275, %v274
  %v307 = vpack.c.b16 %v277, %v276
  %v308 = vpack.c.b16 %v279, %v278
  %v309 = vpack.c.b16 %v281, %v280
  %v310 = vpack.c.b16 %v283, %v282
  %v311 = vpack.c.b16 %v285, %v284
  %v312 = vpack.c.b16 %v287, %v286
  %v313 = vpack.c.b16 %v289, %v288
  %v314 = vpack.c.b16 %v291, %v290
  %v315 = vpack.c.b16 %v293, %v292
  %v316 = vpack.c.b16 %v295, %v294
  %v317 = vpack.c.b16 %v297, %v296
  %v318 = vpack.c.b16 %v299, %v298
  %v319 = vpack.c.b16 %v301, %v300
  %v320 = vpack.c.b16 %v303, %v302
  %v321 = vpack.c.b16 %v305, %v304
  %338 = vmatprep.subr.bf16.mxu0 0
  %339 = vmatpush1.bf16.msra.mxu0 %v313
  %340 = vmatprep.subr.bf16.mxu0 0
  %341 = vmatpush1.bf16.msra.mxu0 %v312
  %342 = vmatprep.subr.bf16.mxu0 0
  %343 = vmatpush1.bf16.msra.mxu0 %v311
  %344 = vmatprep.subr.bf16.mxu0 0
  %345 = vmatpush1.bf16.msra.mxu0 %v310
  %346 = vmatprep.subr.bf16.mxu0 0
  %347 = vmatpush1.bf16.msra.mxu0 %v309
  %348 = vmatprep.subr.bf16.mxu0 0
  %349 = vmatpush1.bf16.msra.mxu0 %v308
  %350 = vmatprep.subr.bf16.mxu0 0
  %351 = vmatpush1.bf16.msra.mxu0 %v307
  %352 = vmatprep.subr.bf16.mxu0 0
  %353 = vmatpush1.bf16.msra.mxu0 %v306
  %354 = vmatprep.subr.bf16.mxu0 0
  %355 = vmatpush2.bf16.msra.mxu0 %v321
  %356 = vmatprep.subr.bf16.mxu0 0
  %357 = vmatpush2.bf16.msra.mxu0 %v320
  %358 = vmatprep.subr.bf16.mxu0 0
  %359 = vmatpush2.bf16.msra.mxu0 %v319
  %360 = vmatprep.subr.bf16.mxu0 0
  %361 = vmatpush2.bf16.msra.mxu0 %v318
  %362 = vmatprep.subr.bf16.mxu0 0
  %363 = vmatpush2.bf16.msra.mxu0 %v317
  %364 = vmatprep.subr.bf16.mxu0 0
  %365 = vmatpush2.bf16.msra.mxu0 %v316
  %366 = vmatprep.subr.bf16.mxu0 0
  %367 = vmatpush2.bf16.msra.mxu0 %v315
  %368 = vmatprep.subr.bf16.mxu0 0
  %369 = vmatpush2.bf16.msra.mxu0 %v314
  %370 = vmatprep.mubr.bf16.mxu0 %v179
  %371 = vmatmul.mubr.bf16.gmra.mxu0 %v178
  %v372 = vpop.f32.mrf.mxu0
  %v373 = vadd.f32 0.0, %v372
  %v374 = vpop.f32.mrf.mxu0
  %v375 = vpop.f32.mrf.mxu0
  %v376 = vadd.f32 0.0, %v375
  %v377 = vpop.f32.mrf.mxu0
  %378 = vmatprep.mubr.bf16.mxu0 %v181
  %379 = vmatmul.mubr.bf16.gmra.mxu0 %v180
  %v380 = vpop.f32.mrf.mxu0
  %v381 = vadd.f32 0.0, %v380
  %v382 = vpop.f32.mrf.mxu0
  %v383 = vpop.f32.mrf.mxu0
  %v384 = vadd.f32 0.0, %v383
  %v385 = vpop.f32.mrf.mxu0
  %386 = vmatprep.mubr.bf16.mxu0 %v183
  %387 = vmatmul.mubr.bf16.gmra.mxu0 %v182
  %v388 = vpop.f32.mrf.mxu0
  %v389 = vadd.f32 0.0, %v388
  %v390 = vpop.f32.mrf.mxu0
  %v391 = vpop.f32.mrf.mxu0
  %v392 = vadd.f32 0.0, %v391
  %v393 = vpop.f32.mrf.mxu0
  %394 = vmatprep.mubr.bf16.mxu0 %v185
  %395 = vmatmul.mubr.bf16.gmra.mxu0 %v184
  %v396 = vpop.f32.mrf.mxu0
  %v397 = vadd.f32 0.0, %v396
  %v398 = vpop.f32.mrf.mxu0
  %v399 = vpop.f32.mrf.mxu0
  %v400 = vadd.f32 0.0, %v399
  %v401 = vpop.f32.mrf.mxu0
  %402 = vmatprep.mubr.bf16.mxu0 %v187
  %403 = vmatmul.mubr.bf16.gmra.mxu0 %v186
  %v404 = vpop.f32.mrf.mxu0
  %v405 = vadd.f32 0.0, %v404
  %v406 = vpop.f32.mrf.mxu0
  %v407 = vpop.f32.mrf.mxu0
  %v408 = vadd.f32 0.0, %v407
  %v409 = vpop.f32.mrf.mxu0
  %410 = vmatprep.mubr.bf16.mxu0 %v189
  %411 = vmatmul.mubr.bf16.gmra.mxu0 %v188
  %v412 = vpop.f32.mrf.mxu0
  %v413 = vadd.f32 0.0, %v412
  %v414 = vpop.f32.mrf.mxu0
  %v415 = vpop.f32.mrf.mxu0
  %v416 = vadd.f32 0.0, %v415
  %v417 = vpop.f32.mrf.mxu0
  %418 = vmatprep.mubr.bf16.mxu0 %v191
  %419 = vmatmul.mubr.bf16.gmra.mxu0 %v190
  %v420 = vpop.f32.mrf.mxu0
  %v421 = vadd.f32 0.0, %v420
  %v422 = vpop.f32.mrf.mxu0
  %v423 = vpop.f32.mrf.mxu0
  %v424 = vadd.f32 0.0, %v423
  %v425 = vpop.f32.mrf.mxu0
  %426 = vmatprep.mubr.bf16.mxu0 %v193
  %427 = vmatmul.mubr.bf16.gmra.mxu0 %v192
  %v428 = vpop.f32.mrf.mxu0
  %v429 = vadd.f32 0.0, %v428
  %v430 = vpop.f32.mrf.mxu0
  %v431 = vpop.f32.mrf.mxu0
  %v432 = vadd.f32 0.0, %v431
  %v433 = vpop.f32.mrf.mxu0
  %434 = vmatprep.mubr.bf16.mxu0 %v195
  %435 = vmatmul.mubr.bf16.gmra.mxu0 %v194
  %v436 = vpop.f32.mrf.mxu0
  %v437 = vadd.f32 0.0, %v436
  %v438 = vpop.f32.mrf.mxu0
  %v439 = vpop.f32.mrf.mxu0
  %v440 = vadd.f32 0.0, %v439
  %v441 = vpop.f32.mrf.mxu0
  %442 = vmatprep.mubr.bf16.mxu0 %v197
  %443 = vmatmul.mubr.bf16.gmra.mxu0 %v196
  %v444 = vpop.f32.mrf.mxu0
  %v445 = vadd.f32 0.0, %v444
  %v446 = vpop.f32.mrf.mxu0
  %v447 = vpop.f32.mrf.mxu0
  %v448 = vadd.f32 0.0, %v447
  %v449 = vpop.f32.mrf.mxu0
  %450 = vmatprep.mubr.bf16.mxu0 %v199
  %451 = vmatmul.mubr.bf16.gmra.mxu0 %v198
  %v452 = vpop.f32.mrf.mxu0
  %v453 = vadd.f32 0.0, %v452
  %v454 = vpop.f32.mrf.mxu0
  %v455 = vpop.f32.mrf.mxu0
  %v456 = vadd.f32 0.0, %v455
  %v457 = vpop.f32.mrf.mxu0
  %458 = vmatprep.mubr.bf16.mxu0 %v201
  %459 = vmatmul.mubr.bf16.gmra.mxu0 %v200
  %v460 = vpop.f32.mrf.mxu0
  %v461 = vadd.f32 0.0, %v460
  %v462 = vpop.f32.mrf.mxu0
  %v463 = vpop.f32.mrf.mxu0
  %v464 = vadd.f32 0.0, %v463
  %v465 = vpop.f32.mrf.mxu0
  %466 = vmatprep.mubr.bf16.mxu0 %v203
  %467 = vmatmul.mubr.bf16.gmra.mxu0 %v202
  %v468 = vpop.f32.mrf.mxu0
  %v469 = vadd.f32 0.0, %v468
  %v470 = vpop.f32.mrf.mxu0
  %v471 = vpop.f32.mrf.mxu0
  %v472 = vadd.f32 0.0, %v471
  %v473 = vpop.f32.mrf.mxu0
  %474 = vmatprep.mubr.bf16.mxu0 %v205
  %475 = vmatmul.mubr.bf16.gmra.mxu0 %v204
  %v476 = vpop.f32.mrf.mxu0
  %v477 = vadd.f32 0.0, %v476
  %v478 = vpop.f32.mrf.mxu0
  %v479 = vpop.f32.mrf.mxu0
  %v480 = vadd.f32 0.0, %v479
  %v481 = vpop.f32.mrf.mxu0
  %482 = vmatprep.mubr.bf16.mxu0 %v207
  %483 = vmatmul.mubr.bf16.gmra.mxu0 %v206
  %v484 = vpop.f32.mrf.mxu0
  %v485 = vadd.f32 0.0, %v484
  %v486 = vpop.f32.mrf.mxu0
  %v487 = vpop.f32.mrf.mxu0
  %v488 = vadd.f32 0.0, %v487
  %v489 = vpop.f32.mrf.mxu0
  %490 = vmatprep.mubr.bf16.mxu0 %v209
  %491 = vmatmul.mubr.bf16.gmra.mxu0 %v208
  %v492 = vpop.f32.mrf.mxu0
  %v493 = vadd.f32 0.0, %v492
  %v494 = vpop.f32.mrf.mxu0
  %v495 = vpop.f32.mrf.mxu0
  %v496 = vadd.f32 0.0, %v495
  %v497 = vpop.f32.mrf.mxu0
  %498 = vdwg.mxu0
  %v499 = vpack.c.bf16 %v376, %v373
  %v500 = vpack.c.bf16 %v384, %v381
  %v501 = vpack.c.bf16 %v392, %v389
  %v502 = vpack.c.bf16 %v400, %v397
  %v503 = vpack.c.bf16 %v408, %v405
  %v504 = vpack.c.bf16 %v416, %v413
  %v505 = vpack.c.bf16 %v424, %v421
  %v506 = vpack.c.bf16 %v432, %v429
  %v507 = vpack.c.bf16 %v440, %v437
  %v508 = vpack.c.bf16 %v448, %v445
  %v509 = vpack.c.bf16 %v456, %v453
  %v510 = vpack.c.bf16 %v464, %v461
  %v511 = vpack.c.bf16 %v472, %v469
  %v512 = vpack.c.bf16 %v480, %v477
  %v513 = vpack.c.bf16 %v488, %v485
  %v514 = vpack.c.bf16 %v496, %v493
  %v515 = vld [vmem:[%s2] sm:$0xf]
  %v516 = vld [vmem:[%s2 + $0x4] sm:$0xf]
  %v517 = vld [vmem:[%s2 + $0x8] sm:$0xf]
  %v518 = vld [vmem:[%s2 + $0xc] sm:$0xf]
  %v519 = vld [vmem:[%s2 + $0x10] sm:$0xf]
  %v520 = vld [vmem:[%s2 + $0x14] sm:$0xf]
  %v521 = vld [vmem:[%s2 + $0x18] sm:$0xf]
  %v522 = vld [vmem:[%s2 + $0x1c] sm:$0xf]
  %v523 = vld [vmem:[%s2 + $0x20] sm:$0xf]
  %v524 = vld [vmem:[%s2 + $0x24] sm:$0xf]
  %v525 = vld [vmem:[%s2 + $0x28] sm:$0xf]
  %v526 = vld [vmem:[%s2 + $0x2c] sm:$0xf]
  %v527 = vld [vmem:[%s2 + $0x30] sm:$0xf]
  %v528 = vld [vmem:[%s2 + $0x34] sm:$0xf]
  %v529 = vld [vmem:[%s2 + $0x38] sm:$0xf]
  %v530 = vld [vmem:[%s2 + $0x3c] sm:$0xf]
  %v531 = vld [vmem:[%s3] sm:$0x1]
  %v533 = vlaneseq
  %v534 = vshrl.u32 %v533, 7
  %v535 = vsub.s32 0, %v534
  %v536 = vrot.slane %v531, %v535
  %v554 = vunpack.c.l.b16 %v515
  %v555 = vunpack.c.l.b16 %v516
  %v556 = vunpack.c.l.b16 %v517
  %v557 = vunpack.c.l.b16 %v518
  %v558 = vunpack.c.l.b16 %v519
  %v559 = vunpack.c.l.b16 %v520
  %v560 = vunpack.c.l.b16 %v521
  %v561 = vunpack.c.l.b16 %v522
  %v562 = vunpack.c.l.b16 %v523
  %v563 = vunpack.c.l.b16 %v524
  %v564 = vunpack.c.l.b16 %v525
  %v565 = vunpack.c.l.b16 %v526
  %v566 = vunpack.c.l.b16 %v527
  %v567 = vunpack.c.l.b16 %v528
  %v568 = vunpack.c.l.b16 %v529
  %v569 = vunpack.c.l.b16 %v530
  %v570 = vpack.c.b16 %v555, %v554
  %v571 = vpack.c.b16 %v557, %v556
  %v572 = vpack.c.b16 %v559, %v558
  %v573 = vpack.c.b16 %v561, %v560
  %v574 = vpack.c.b16 %v563, %v562
  %v575 = vpack.c.b16 %v565, %v564
  %v576 = vpack.c.b16 %v567, %v566
  %v577 = vpack.c.b16 %v569, %v568
  %586 = vmatprep.subr.bf16.mxu0 0
  %587 = vmatpush1.bf16.msra.mxu0 %v577
  %588 = vmatprep.subr.bf16.mxu0 0
  %589 = vmatpush1.bf16.msra.mxu0 %v576
  %590 = vmatprep.subr.bf16.mxu0 0
  %591 = vmatpush1.bf16.msra.mxu0 %v575
  %592 = vmatprep.subr.bf16.mxu0 0
  %593 = vmatpush1.bf16.msra.mxu0 %v574
  %594 = vmatprep.subr.bf16.mxu0 0
  %595 = vmatpush1.bf16.msra.mxu0 %v573
  %596 = vmatprep.subr.bf16.mxu0 0
  %597 = vmatpush1.bf16.msra.mxu0 %v572
  %598 = vmatprep.subr.bf16.mxu0 0
  %599 = vmatpush1.bf16.msra.mxu0 %v571
  %600 = vmatprep.subr.bf16.mxu0 0
  %601 = vmatpush1.bf16.msra.mxu0 %v570
  %602 = vmatprep.subr.bf16.mxu0 0
  %603 = vmatpush2.bf16.msra.mxu0 0
  %604 = vmatprep.subr.bf16.mxu0 0
  %605 = vmatpush2.bf16.msra.mxu0 0
  %606 = vmatprep.subr.bf16.mxu0 0
  %607 = vmatpush2.bf16.msra.mxu0 0
  %608 = vmatprep.subr.bf16.mxu0 0
  %609 = vmatpush2.bf16.msra.mxu0 0
  %610 = vmatprep.subr.bf16.mxu0 0
  %611 = vmatpush2.bf16.msra.mxu0 0
  %612 = vmatprep.subr.bf16.mxu0 0
  %613 = vmatpush2.bf16.msra.mxu0 0
  %614 = vmatprep.subr.bf16.mxu0 0
  %615 = vmatpush2.bf16.msra.mxu0 0
  %616 = vmatprep.subr.bf16.mxu0 0
  %617 = vmatpush2.bf16.msra.mxu0 0
  %618 = vmatprep.mubr.bf16.mxu0 0
  %619 = vmatmul.mubr.bf16.gmra.mxu0 %v499
  %v620 = vpop.f32.mrf.mxu0
  %v621 = vadd.f32 %v536, %v620
  %v622 = vpop.f32.mrf.mxu0
  %v623 = vpop.f32.mrf.mxu0
  %v624 = vadd.f32 %v536, %v623
  %v625 = vpop.f32.mrf.mxu0
  %626 = vmatprep.mubr.bf16.mxu0 0
  %627 = vmatmul.mubr.bf16.gmra.mxu0 %v500
  %v628 = vpop.f32.mrf.mxu0
  %v629 = vadd.f32 %v536, %v628
  %v630 = vpop.f32.mrf.mxu0
  %v631 = vpop.f32.mrf.mxu0
  %v632 = vadd.f32 %v536, %v631
  %v633 = vpop.f32.mrf.mxu0
  %634 = vmatprep.mubr.bf16.mxu0 0
  %635 = vmatmul.mubr.bf16.gmra.mxu0 %v501
  %v636 = vpop.f32.mrf.mxu0
  %v637 = vadd.f32 %v536, %v636
  %v638 = vpop.f32.mrf.mxu0
  %v639 = vpop.f32.mrf.mxu0
  %v640 = vadd.f32 %v536, %v639
  %v641 = vpop.f32.mrf.mxu0
  %642 = vmatprep.mubr.bf16.mxu0 0
  %643 = vmatmul.mubr.bf16.gmra.mxu0 %v502
  %v644 = vpop.f32.mrf.mxu0
  %v645 = vadd.f32 %v536, %v644
  %v646 = vpop.f32.mrf.mxu0
  %v647 = vpop.f32.mrf.mxu0
  %v648 = vadd.f32 %v536, %v647
  %v649 = vpop.f32.mrf.mxu0
  %650 = vmatprep.mubr.bf16.mxu0 0
  %651 = vmatmul.mubr.bf16.gmra.mxu0 %v503
  %v652 = vpop.f32.mrf.mxu0
  %v653 = vadd.f32 %v536, %v652
  %v654 = vpop.f32.mrf.mxu0
  %v655 = vpop.f32.mrf.mxu0
  %v656 = vadd.f32 %v536, %v655
  %v657 = vpop.f32.mrf.mxu0
  %658 = vmatprep.mubr.bf16.mxu0 0
  %659 = vmatmul.mubr.bf16.gmra.mxu0 %v504
  %v660 = vpop.f32.mrf.mxu0
  %v661 = vadd.f32 %v536, %v660
  %v662 = vpop.f32.mrf.mxu0
  %v663 = vpop.f32.mrf.mxu0
  %v664 = vadd.f32 %v536, %v663
  %v665 = vpop.f32.mrf.mxu0
  %666 = vmatprep.mubr.bf16.mxu0 0
  %667 = vmatmul.mubr.bf16.gmra.mxu0 %v505
  %v668 = vpop.f32.mrf.mxu0
  %v669 = vadd.f32 %v536, %v668
  %v670 = vpop.f32.mrf.mxu0
  %v671 = vpop.f32.mrf.mxu0
  %v672 = vadd.f32 %v536, %v671
  %v673 = vpop.f32.mrf.mxu0
  %674 = vmatprep.mubr.bf16.mxu0 0
  %675 = vmatmul.mubr.bf16.gmra.mxu0 %v506
  %v676 = vpop.f32.mrf.mxu0
  %v677 = vadd.f32 %v536, %v676
  %v678 = vpop.f32.mrf.mxu0
  %v679 = vpop.f32.mrf.mxu0
  %v680 = vadd.f32 %v536, %v679
  %v681 = vpop.f32.mrf.mxu0
  %682 = vmatprep.mubr.bf16.mxu0 0
  %683 = vmatmul.mubr.bf16.gmra.mxu0 %v507
  %v684 = vpop.f32.mrf.mxu0
  %v685 = vadd.f32 %v536, %v684
  %v686 = vpop.f32.mrf.mxu0
  %v687 = vpop.f32.mrf.mxu0
  %v688 = vadd.f32 %v536, %v687
  %v689 = vpop.f32.mrf.mxu0
  %690 = vmatprep.mubr.bf16.mxu0 0
  %691 = vmatmul.mubr.bf16.gmra.mxu0 %v508
  %v692 = vpop.f32.mrf.mxu0
  %v693 = vadd.f32 %v536, %v692
  %v694 = vpop.f32.mrf.mxu0
  %v695 = vpop.f32.mrf.mxu0
  %v696 = vadd.f32 %v536, %v695
  %v697 = vpop.f32.mrf.mxu0
  %698 = vmatprep.mubr.bf16.mxu0 0
  %699 = vmatmul.mubr.bf16.gmra.mxu0 %v509
  %v700 = vpop.f32.mrf.mxu0
  %v701 = vadd.f32 %v536, %v700
  %v702 = vpop.f32.mrf.mxu0
  %v703 = vpop.f32.mrf.mxu0
  %v704 = vadd.f32 %v536, %v703
  %v705 = vpop.f32.mrf.mxu0
  %706 = vmatprep.mubr.bf16.mxu0 0
  %707 = vmatmul.mubr.bf16.gmra.mxu0 %v510
  %v708 = vpop.f32.mrf.mxu0
  %v709 = vadd.f32 %v536, %v708
  %v710 = vpop.f32.mrf.mxu0
  %v711 = vpop.f32.mrf.mxu0
  %v712 = vadd.f32 %v536, %v711
  %v713 = vpop.f32.mrf.mxu0
  %714 = vmatprep.mubr.bf16.mxu0 0
  %715 = vmatmul.mubr.bf16.gmra.mxu0 %v511
  %v716 = vpop.f32.mrf.mxu0
  %v717 = vadd.f32 %v536, %v716
  %v718 = vpop.f32.mrf.mxu0
  %v719 = vpop.f32.mrf.mxu0
  %v720 = vadd.f32 %v536, %v719
  %v721 = vpop.f32.mrf.mxu0
  %722 = vmatprep.mubr.bf16.mxu0 0
  %723 = vmatmul.mubr.bf16.gmra.mxu0 %v512
  %v724 = vpop.f32.mrf.mxu0
  %v725 = vadd.f32 %v536, %v724
  %v726 = vpop.f32.mrf.mxu0
  %v727 = vpop.f32.mrf.mxu0
  %v728 = vadd.f32 %v536, %v727
  %v729 = vpop.f32.mrf.mxu0
  %730 = vmatprep.mubr.bf16.mxu0 0
  %731 = vmatmul.mubr.bf16.gmra.mxu0 %v513
  %v732 = vpop.f32.mrf.mxu0
  %v733 = vadd.f32 %v536, %v732
  %v734 = vpop.f32.mrf.mxu0
  %v735 = vpop.f32.mrf.mxu0
  %v736 = vadd.f32 %v536, %v735
  %v737 = vpop.f32.mrf.mxu0
  %738 = vmatprep.mubr.bf16.mxu0 0
  %739 = vmatmul.mubr.bf16.gmra.mxu0 %v514
  %v740 = vpop.f32.mrf.mxu0
  %v741 = vadd.f32 %v536, %v740
  %v742 = vpop.f32.mrf.mxu0
  %v743 = vpop.f32.mrf.mxu0
  %v744 = vadd.f32 %v536, %v743
  %v745 = vpop.f32.mrf.mxu0
  %746 = vdwg.mxu0
  %747 = vst [vmem:[%s4] sm:$0xff] %v621
  %748 = vst [vmem:[%s4 + $0x8] sm:$0xff] %v624
  %749 = vst [vmem:[%s4 + $0x10] sm:$0xff] %v629
  %750 = vst [vmem:[%s4 + $0x18] sm:$0xff] %v632
  %751 = vst [vmem:[%s4 + $0x20] sm:$0xff] %v637
  %752 = vst [vmem:[%s4 + $0x28] sm:$0xff] %v640
  %753 = vst [vmem:[%s4 + $0x30] sm:$0xff] %v645
  %754 = vst [vmem:[%s4 + $0x38] sm:$0xff] %v648
  %755 = vst [vmem:[%s4 + $0x40] sm:$0xff] %v653
  %756 = vst [vmem:[%s4 + $0x48] sm:$0xff] %v656
  %757 = vst [vmem:[%s4 + $0x50] sm:$0xff] %v661
  %758 = vst [vmem:[%s4 + $0x58] sm:$0xff] %v664
  %759 = vst [vmem:[%s4 + $0x60] sm:$0xff] %v669
  %760 = vst [vmem:[%s4 + $0x68] sm:$0xff] %v672
  %761 = vst [vmem:[%s4 + $0x70] sm:$0xff] %v677
  %762 = vst [vmem:[%s4 + $0x78] sm:$0xff] %v680
  %763 = vst [vmem:[%s4 + $0x80] sm:$0xff] %v685
  %764 = vst [vmem:[%s4 + $0x88] sm:$0xff] %v688
  %765 = vst [vmem:[%s4 + $0x90] sm:$0xff] %v693
  %766 = vst [vmem:[%s4 + $0x98] sm:$0xff] %v696
  %767 = vst [vmem:[%s4 + $0xa0] sm:$0xff] %v701
  %768 = vst [vmem:[%s4 + $0xa8] sm:$0xff] %v704
  %769 = vst [vmem:[%s4 + $0xb0] sm:$0xff] %v709
  %770 = vst [vmem:[%s4 + $0xb8] sm:$0xff] %v712
  %771 = vst [vmem:[%s4 + $0xc0] sm:$0xff] %v717
  %772 = vst [vmem:[%s4 + $0xc8] sm:$0xff] %v720
  %773 = vst [vmem:[%s4 + $0xd0] sm:$0xff] %v725
  %774 = vst [vmem:[%s4 + $0xd8] sm:$0xff] %v728
  %775 = vst [vmem:[%s4 + $0xe0] sm:$0xff] %v733
  %776 = vst [vmem:[%s4 + $0xe8] sm:$0xff] %v736
  %777 = vst [vmem:[%s4 + $0xf0] sm:$0xff] %v741
  %778 = vst [vmem:[%s4 + $0xf8] sm:$0xff] %v744
  // Predicated region
  $region18: #{graph_encoder_forward.3} parent=0 // pred_check
    _
  $region19: #{graph_encoder_forward.3} parent=0 // pred_check_branch
    %780 = sbr.rel (0) target = $region21
  $region20: #{graph_encoder_forward.3} parent=0 // pred_region
    _
  $region21: #{graph_encoder_forward.3} parent=0 // pred_fallthru
    _
  // Predicated region
  $region22: #{graph_encoder_forward.3} parent=0 // pred_check
    _
  $region23: #{graph_encoder_forward.3} parent=0 // pred_check_branch
    %782 = sbr.rel (0) target = $region25
  $region24: #{graph_encoder_forward.3} parent=0 // pred_region
    _
  $region25: #{graph_encoder_forward.3} parent=0 // pred_fallthru
    _

// kernel: graph_encoder_forward.2
$region0: #{graph_encoder_forward.2}
  #allocation0 [shape = 'u32[]', space=smem, size = 0x4, offset = 0x4, fixed_abs, tag = 'smem constant byte address 0x4 - core index']
  #allocation1 [shape = 'u32[144,128]{1,0:T(1,128)}', space=vmem, size = 0x12000, scoped, tag = 'internal scratch']
  %s0 = inlined_call_operand.vmem [shape: bf16[256,256], index: 0, kind: input, shape index: {}]
  %s1 = inlined_call_operand.vmem [shape: bf16[256,128], index: 1, kind: input, shape index: {}]
  %s2 = inlined_call_operand.vmem [shape: bf16[128,128], index: 2, kind: input, shape index: {}]
  %s3 = inlined_call_operand.vmem [shape: f32[1,128], index: 3, kind: input, shape index: {}]
  %s4 = inlined_call_operand.vmem [shape: bf16[256,128], index: 4, kind: output, shape index: {}]
  %s5 = sld [smem:[#allocation0]]
  $region26: #{graph_encoder_forward.2} parent=0
    _
  %s7 = ssub.s32 1, %s5
  %s8 = scalar_select 0, %s7, %s5
  // Predicated region
  $region2: #{graph_encoder_forward.2} parent=0 // pred_check
    _
  $region3: #{graph_encoder_forward.2} parent=0 // pred_check_branch
    %10 = sbr.rel (0) target = $region5
  $region4: #{graph_encoder_forward.2} parent=0 // pred_region
    _
  $region5: #{graph_encoder_forward.2} parent=0 // pred_fallthru
    _
  // Predicated region
  $region6: #{graph_encoder_forward.2} parent=0 // pred_check
    _
  $region7: #{graph_encoder_forward.2} parent=0 // pred_check_branch
    %12 = sbr.rel (0) target = $region9
  $region8: #{graph_encoder_forward.2} parent=0 // pred_region
    _
  $region9: #{graph_encoder_forward.2} parent=0 // pred_fallthru
    _
  // Predicated region
  $region10: #{graph_encoder_forward.2} parent=0 // pred_check
    _
  $region11: #{graph_encoder_forward.2} parent=0 // pred_check_branch
    %14 = sbr.rel (0) target = $region13
  $region12: #{graph_encoder_forward.2} parent=0 // pred_region
    _
  $region13: #{graph_encoder_forward.2} parent=0 // pred_fallthru
    _
  // Predicated region
  $region14: #{graph_encoder_forward.2} parent=0 // pred_check
    _
  $region15: #{graph_encoder_forward.2} parent=0 // pred_check_branch
    %16 = sbr.rel (0) target = $region17
  $region16: #{graph_encoder_forward.2} parent=0 // pred_region
    _
  $region17: #{graph_encoder_forward.2} parent=0 // pred_fallthru
    _
  %v18 = vld [vmem:[%s0] sm:$0xff]
  %v19 = vld [vmem:[%s0 + $0x8] sm:$0xff]
  %v20 = vld [vmem:[%s0 + $0x10] sm:$0xff]
  %v21 = vld [vmem:[%s0 + $0x18] sm:$0xff]
  %v22 = vld [vmem:[%s0 + $0x20] sm:$0xff]
  %v23 = vld [vmem:[%s0 + $0x28] sm:$0xff]
  %v24 = vld [vmem:[%s0 + $0x30] sm:$0xff]
  %v25 = vld [vmem:[%s0 + $0x38] sm:$0xff]
  %v26 = vld [vmem:[%s0 + $0x40] sm:$0xff]
  %v27 = vld [vmem:[%s0 + $0x48] sm:$0xff]
  %v28 = vld [vmem:[%s0 + $0x50] sm:$0xff]
  %v29 = vld [vmem:[%s0 + $0x58] sm:$0xff]
  %v30 = vld [vmem:[%s0 + $0x60] sm:$0xff]
  %v31 = vld [vmem:[%s0 + $0x68] sm:$0xff]
  %v32 = vld [vmem:[%s0 + $0x70] sm:$0xff]
  %v33 = vld [vmem:[%s0 + $0x78] sm:$0xff]
  %v34 = vld [vmem:[%s0 + $0x80] sm:$0xff]
  %v35 = vld [vmem:[%s0 + $0x88] sm:$0xff]
  %v36 = vld [vmem:[%s0 + $0x90] sm:$0xff]
  %v37 = vld [vmem:[%s0 + $0x98] sm:$0xff]
  %v38 = vld [vmem:[%s0 + $0xa0] sm:$0xff]
  %v39 = vld [vmem:[%s0 + $0xa8] sm:$0xff]
  %v40 = vld [vmem:[%s0 + $0xb0] sm:$0xff]
  %v41 = vld [vmem:[%s0 + $0xb8] sm:$0xff]
  %v42 = vld [vmem:[%s0 + $0xc0] sm:$0xff]
  %v43 = vld [vmem:[%s0 + $0xc8] sm:$0xff]
  %v44 = vld [vmem:[%s0 + $0xd0] sm:$0xff]
  %v45 = vld [vmem:[%s0 + $0xd8] sm:$0xff]
  %v46 = vld [vmem:[%s0 + $0xe0] sm:$0xff]
  %v47 = vld [vmem:[%s0 + $0xe8] sm:$0xff]
  %v48 = vld [vmem:[%s0 + $0xf0] sm:$0xff]
  %v49 = vld [vmem:[%s0 + $0xf8] sm:$0xff]
  %v50 = vld [vmem:[%s1] sm:$0xf]
  %v51 = vld [vmem:[%s1 + $0x4] sm:$0xf]
  %v52 = vld [vmem:[%s1 + $0x8] sm:$0xf]
  %v53 = vld [vmem:[%s1 + $0xc] sm:$0xf]
  %v54 = vld [vmem:[%s1 + $0x10] sm:$0xf]
  %v55 = vld [vmem:[%s1 + $0x14] sm:$0xf]
  %v56 = vld [vmem:[%s1 + $0x18] sm:$0xf]
  %v57 = vld [vmem:[%s1 + $0x1c] sm:$0xf]
  %v58 = vld [vmem:[%s1 + $0x20] sm:$0xf]
  %v59 = vld [vmem:[%s1 + $0x24] sm:$0xf]
  %v60 = vld [vmem:[%s1 + $0x28] sm:$0xf]
  %v61 = vld [vmem:[%s1 + $0x2c] sm:$0xf]
  %v62 = vld [vmem:[%s1 + $0x30] sm:$0xf]
  %v63 = vld [vmem:[%s1 + $0x34] sm:$0xf]
  %v64 = vld [vmem:[%s1 + $0x38] sm:$0xf]
  %v65 = vld [vmem:[%s1 + $0x3c] sm:$0xf]
  %v66 = vld [vmem:[%s1 + $0x40] sm:$0xf]
  %v67 = vld [vmem:[%s1 + $0x44] sm:$0xf]
  %v68 = vld [vmem:[%s1 + $0x48] sm:$0xf]
  %v69 = vld [vmem:[%s1 + $0x4c] sm:$0xf]
  %v70 = vld [vmem:[%s1 + $0x50] sm:$0xf]
  %v71 = vld [vmem:[%s1 + $0x54] sm:$0xf]
  %v72 = vld [vmem:[%s1 + $0x58] sm:$0xf]
  %v73 = vld [vmem:[%s1 + $0x5c] sm:$0xf]
  %v74 = vld [vmem:[%s1 + $0x60] sm:$0xf]
  %v75 = vld [vmem:[%s1 + $0x64] sm:$0xf]
  %v76 = vld [vmem:[%s1 + $0x68] sm:$0xf]
  %v77 = vld [vmem:[%s1 + $0x6c] sm:$0xf]
  %v78 = vld [vmem:[%s1 + $0x70] sm:$0xf]
  %v79 = vld [vmem:[%s1 + $0x74] sm:$0xf]
  %v80 = vld [vmem:[%s1 + $0x78] sm:$0xf]
  %v81 = vld [vmem:[%s1 + $0x7c] sm:$0xf]
  %v114 = vunpack.c.l.b16 %v18
  %v115 = vunpack.c.h.b16 %v18
  %v116 = vunpack.c.l.b16 %v19
  %v117 = vunpack.c.h.b16 %v19
  %v118 = vunpack.c.l.b16 %v20
  %v119 = vunpack.c.h.b16 %v20
  %v120 = vunpack.c.l.b16 %v21
  %v121 = vunpack.c.h.b16 %v21
  %v122 = vunpack.c.l.b16 %v22
  %v123 = vunpack.c.h.b16 %v22
  %v124 = vunpack.c.l.b16 %v23
  %v125 = vunpack.c.h.b16 %v23
  %v126 = vunpack.c.l.b16 %v24
  %v127 = vunpack.c.h.b16 %v24
  %v128 = vunpack.c.l.b16 %v25
  %v129 = vunpack.c.h.b16 %v25
  %v130 = vunpack.c.l.b16 %v26
  %v131 = vunpack.c.h.b16 %v26
  %v132 = vunpack.c.l.b16 %v27
  %v133 = vunpack.c.h.b16 %v27
  %v134 = vunpack.c.l.b16 %v28
  %v135 = vunpack.c.h.b16 %v28
  %v136 = vunpack.c.l.b16 %v29
  %v137 = vunpack.c.h.b16 %v29
  %v138 = vunpack.c.l.b16 %v30
  %v139 = vunpack.c.h.b16 %v30
  %v140 = vunpack.c.l.b16 %v31
  %v141 = vunpack.c.h.b16 %v31
  %v142 = vunpack.c.l.b16 %v32
  %v143 = vunpack.c.h.b16 %v32
  %v144 = vunpack.c.l.b16 %v33
  %v145 = vunpack.c.h.b16 %v33
  %v146 = vunpack.c.l.b16 %v34
  %v147 = vunpack.c.h.b16 %v34
  %v148 = vunpack.c.l.b16 %v35
  %v149 = vunpack.c.h.b16 %v35
  %v150 = vunpack.c.l.b16 %v36
  %v151 = vunpack.c.h.b16 %v36
  %v152 = vunpack.c.l.b16 %v37
  %v153 = vunpack.c.h.b16 %v37
  %v154 = vunpack.c.l.b16 %v38
  %v155 = vunpack.c.h.b16 %v38
  %v156 = vunpack.c.l.b16 %v39
  %v157 = vunpack.c.h.b16 %v39
  %v158 = vunpack.c.l.b16 %v40
  %v159 = vunpack.c.h.b16 %v40
  %v160 = vunpack.c.l.b16 %v41
  %v161 = vunpack.c.h.b16 %v41
  %v162 = vunpack.c.l.b16 %v42
  %v163 = vunpack.c.h.b16 %v42
  %v164 = vunpack.c.l.b16 %v43
  %v165 = vunpack.c.h.b16 %v43
  %v166 = vunpack.c.l.b16 %v44
  %v167 = vunpack.c.h.b16 %v44
  %v168 = vunpack.c.l.b16 %v45
  %v169 = vunpack.c.h.b16 %v45
  %v170 = vunpack.c.l.b16 %v46
  %v171 = vunpack.c.h.b16 %v46
  %v172 = vunpack.c.l.b16 %v47
  %v173 = vunpack.c.h.b16 %v47
  %v174 = vunpack.c.l.b16 %v48
  %v175 = vunpack.c.h.b16 %v48
  %v176 = vunpack.c.l.b16 %v49
  %v177 = vunpack.c.h.b16 %v49
  %v178 = vpack.c.b16 %v116, %v114
  %v179 = vpack.c.b16 %v117, %v115
  %v180 = vpack.c.b16 %v120, %v118
  %v181 = vpack.c.b16 %v121, %v119
  %v182 = vpack.c.b16 %v124, %v122
  %v183 = vpack.c.b16 %v125, %v123
  %v184 = vpack.c.b16 %v128, %v126
  %v185 = vpack.c.b16 %v129, %v127
  %v186 = vpack.c.b16 %v132, %v130
  %v187 = vpack.c.b16 %v133, %v131
  %v188 = vpack.c.b16 %v136, %v134
  %v189 = vpack.c.b16 %v137, %v135
  %v190 = vpack.c.b16 %v140, %v138
  %v191 = vpack.c.b16 %v141, %v139
  %v192 = vpack.c.b16 %v144, %v142
  %v193 = vpack.c.b16 %v145, %v143
  %v194 = vpack.c.b16 %v148, %v146
  %v195 = vpack.c.b16 %v149, %v147
  %v196 = vpack.c.b16 %v152, %v150
  %v197 = vpack.c.b16 %v153, %v151
  %v198 = vpack.c.b16 %v156, %v154
  %v199 = vpack.c.b16 %v157, %v155
  %v200 = vpack.c.b16 %v160, %v158
  %v201 = vpack.c.b16 %v161, %v159
  %v202 = vpack.c.b16 %v164, %v162
  %v203 = vpack.c.b16 %v165, %v163
  %v204 = vpack.c.b16 %v168, %v166
  %v205 = vpack.c.b16 %v169, %v167
  %v206 = vpack.c.b16 %v172, %v170
  %v207 = vpack.c.b16 %v173, %v171
  %v208 = vpack.c.b16 %v176, %v174
  %v209 = vpack.c.b16 %v177, %v175
  %v274 = vunpack.c.l.b16 %v50
  %v275 = vunpack.c.l.b16 %v51
  %v276 = vunpack.c.l.b16 %v52
  %v277 = vunpack.c.l.b16 %v53
  %v278 = vunpack.c.l.b16 %v54
  %v279 = vunpack.c.l.b16 %v55
  %v280 = vunpack.c.l.b16 %v56
  %v281 = vunpack.c.l.b16 %v57
  %v282 = vunpack.c.l.b16 %v58
  %v283 = vunpack.c.l.b16 %v59
  %v284 = vunpack.c.l.b16 %v60
  %v285 = vunpack.c.l.b16 %v61
  %v286 = vunpack.c.l.b16 %v62
  %v287 = vunpack.c.l.b16 %v63
  %v288 = vunpack.c.l.b16 %v64
  %v289 = vunpack.c.l.b16 %v65
  %v290 = vunpack.c.l.b16 %v66
  %v291 = vunpack.c.l.b16 %v67
  %v292 = vunpack.c.l.b16 %v68
  %v293 = vunpack.c.l.b16 %v69
  %v294 = vunpack.c.l.b16 %v70
  %v295 = vunpack.c.l.b16 %v71
  %v296 = vunpack.c.l.b16 %v72
  %v297 = vunpack.c.l.b16 %v73
  %v298 = vunpack.c.l.b16 %v74
  %v299 = vunpack.c.l.b16 %v75
  %v300 = vunpack.c.l.b16 %v76
  %v301 = vunpack.c.l.b16 %v77
  %v302 = vunpack.c.l.b16 %v78
  %v303 = vunpack.c.l.b16 %v79
  %v304 = vunpack.c.l.b16 %v80
  %v305 = vunpack.c.l.b16 %v81
  %v306 = vpack.c.b16 %v275, %v274
  %v307 = vpack.c.b16 %v277, %v276
  %v308 = vpack.c.b16 %v279, %v278
  %v309 = vpack.c.b16 %v281, %v280
  %v310 = vpack.c.b16 %v283, %v282
  %v311 = vpack.c.b16 %v285, %v284
  %v312 = vpack.c.b16 %v287, %v286
  %v313 = vpack.c.b16 %v289, %v288
  %v314 = vpack.c.b16 %v291, %v290
  %v315 = vpack.c.b16 %v293, %v292
  %v316 = vpack.c.b16 %v295, %v294
  %v317 = vpack.c.b16 %v297, %v296
  %v318 = vpack.c.b16 %v299, %v298
  %v319 = vpack.c.b16 %v301, %v300
  %v320 = vpack.c.b16 %v303, %v302
  %v321 = vpack.c.b16 %v305, %v304
  %338 = vmatprep.subr.bf16.mxu0 0
  %339 = vmatpush1.bf16.msra.mxu0 %v313
  %340 = vmatprep.subr.bf16.mxu0 0
  %341 = vmatpush1.bf16.msra.mxu0 %v312
  %342 = vmatprep.subr.bf16.mxu0 0
  %343 = vmatpush1.bf16.msra.mxu0 %v311
  %344 = vmatprep.subr.bf16.mxu0 0
  %345 = vmatpush1.bf16.msra.mxu0 %v310
  %346 = vmatprep.subr.bf16.mxu0 0
  %347 = vmatpush1.bf16.msra.mxu0 %v309
  %348 = vmatprep.subr.bf16.mxu0 0
  %349 = vmatpush1.bf16.msra.mxu0 %v308
  %350 = vmatprep.subr.bf16.mxu0 0
  %351 = vmatpush1.bf16.msra.mxu0 %v307
  %352 = vmatprep.subr.bf16.mxu0 0
  %353 = vmatpush1.bf16.msra.mxu0 %v306
  %354 = vmatprep.subr.bf16.mxu0 0
  %355 = vmatpush2.bf16.msra.mxu0 %v321
  %356 = vmatprep.subr.bf16.mxu0 0
  %357 = vmatpush2.bf16.msra.mxu0 %v320
  %358 = vmatprep.subr.bf16.mxu0 0
  %359 = vmatpush2.bf16.msra.mxu0 %v319
  %360 = vmatprep.subr.bf16.mxu0 0
  %361 = vmatpush2.bf16.msra.mxu0 %v318
  %362 = vmatprep.subr.bf16.mxu0 0
  %363 = vmatpush2.bf16.msra.mxu0 %v317
  %364 = vmatprep.subr.bf16.mxu0 0
  %365 = vmatpush2.bf16.msra.mxu0 %v316
  %366 = vmatprep.subr.bf16.mxu0 0
  %367 = vmatpush2.bf16.msra.mxu0 %v315
  %368 = vmatprep.subr.bf16.mxu0 0
  %369 = vmatpush2.bf16.msra.mxu0 %v314
  %370 = vmatprep.mubr.bf16.mxu0 %v179
  %371 = vmatmul.mubr.bf16.gmra.mxu0 %v178
  %v372 = vpop.f32.mrf.mxu0
  %v373 = vadd.f32 0.0, %v372
  %v374 = vpop.f32.mrf.mxu0
  %v375 = vpop.f32.mrf.mxu0
  %v376 = vadd.f32 0.0, %v375
  %v377 = vpop.f32.mrf.mxu0
  %378 = vmatprep.mubr.bf16.mxu0 %v181
  %379 = vmatmul.mubr.bf16.gmra.mxu0 %v180
  %v380 = vpop.f32.mrf.mxu0
  %v381 = vadd.f32 0.0, %v380
  %v382 = vpop.f32.mrf.mxu0
  %v383 = vpop.f32.mrf.mxu0
  %v384 = vadd.f32 0.0, %v383
  %v385 = vpop.f32.mrf.mxu0
  %386 = vmatprep.mubr.bf16.mxu0 %v183
  %387 = vmatmul.mubr.bf16.gmra.mxu0 %v182
  %v388 = vpop.f32.mrf.mxu0
  %v389 = vadd.f32 0.0, %v388
  %v390 = vpop.f32.mrf.mxu0
  %v391 = vpop.f32.mrf.mxu0
  %v392 = vadd.f32 0.0, %v391
  %v393 = vpop.f32.mrf.mxu0
  %394 = vmatprep.mubr.bf16.mxu0 %v185
  %395 = vmatmul.mubr.bf16.gmra.mxu0 %v184
  %v396 = vpop.f32.mrf.mxu0
  %v397 = vadd.f32 0.0, %v396
  %v398 = vpop.f32.mrf.mxu0
  %v399 = vpop.f32.mrf.mxu0
  %v400 = vadd.f32 0.0, %v399
  %v401 = vpop.f32.mrf.mxu0
  %402 = vmatprep.mubr.bf16.mxu0 %v187
  %403 = vmatmul.mubr.bf16.gmra.mxu0 %v186
  %v404 = vpop.f32.mrf.mxu0
  %v405 = vadd.f32 0.0, %v404
  %v406 = vpop.f32.mrf.mxu0
  %v407 = vpop.f32.mrf.mxu0
  %v408 = vadd.f32 0.0, %v407
  %v409 = vpop.f32.mrf.mxu0
  %410 = vmatprep.mubr.bf16.mxu0 %v189
  %411 = vmatmul.mubr.bf16.gmra.mxu0 %v188
  %v412 = vpop.f32.mrf.mxu0
  %v413 = vadd.f32 0.0, %v412
  %v414 = vpop.f32.mrf.mxu0
  %v415 = vpop.f32.mrf.mxu0
  %v416 = vadd.f32 0.0, %v415
  %v417 = vpop.f32.mrf.mxu0
  %418 = vmatprep.mubr.bf16.mxu0 %v191
  %419 = vmatmul.mubr.bf16.gmra.mxu0 %v190
  %v420 = vpop.f32.mrf.mxu0
  %v421 = vadd.f32 0.0, %v420
  %v422 = vpop.f32.mrf.mxu0
  %v423 = vpop.f32.mrf.mxu0
  %v424 = vadd.f32 0.0, %v423
  %v425 = vpop.f32.mrf.mxu0
  %426 = vmatprep.mubr.bf16.mxu0 %v193
  %427 = vmatmul.mubr.bf16.gmra.mxu0 %v192
  %v428 = vpop.f32.mrf.mxu0
  %v429 = vadd.f32 0.0, %v428
  %v430 = vpop.f32.mrf.mxu0
  %v431 = vpop.f32.mrf.mxu0
  %v432 = vadd.f32 0.0, %v431
  %v433 = vpop.f32.mrf.mxu0
  %434 = vmatprep.mubr.bf16.mxu0 %v195
  %435 = vmatmul.mubr.bf16.gmra.mxu0 %v194
  %v436 = vpop.f32.mrf.mxu0
  %v437 = vadd.f32 0.0, %v436
  %v438 = vpop.f32.mrf.mxu0
  %v439 = vpop.f32.mrf.mxu0
  %v440 = vadd.f32 0.0, %v439
  %v441 = vpop.f32.mrf.mxu0
  %442 = vmatprep.mubr.bf16.mxu0 %v197
  %443 = vmatmul.mubr.bf16.gmra.mxu0 %v196
  %v444 = vpop.f32.mrf.mxu0
  %v445 = vadd.f32 0.0, %v444
  %v446 = vpop.f32.mrf.mxu0
  %v447 = vpop.f32.mrf.mxu0
  %v448 = vadd.f32 0.0, %v447
  %v449 = vpop.f32.mrf.mxu0
  %450 = vmatprep.mubr.bf16.mxu0 %v199
  %451 = vmatmul.mubr.bf16.gmra.mxu0 %v198
  %v452 = vpop.f32.mrf.mxu0
  %v453 = vadd.f32 0.0, %v452
  %v454 = vpop.f32.mrf.mxu0
  %v455 = vpop.f32.mrf.mxu0
  %v456 = vadd.f32 0.0, %v455
  %v457 = vpop.f32.mrf.mxu0
  %458 = vmatprep.mubr.bf16.mxu0 %v201
  %459 = vmatmul.mubr.bf16.gmra.mxu0 %v200
  %v460 = vpop.f32.mrf.mxu0
  %v461 = vadd.f32 0.0, %v460
  %v462 = vpop.f32.mrf.mxu0
  %v463 = vpop.f32.mrf.mxu0
  %v464 = vadd.f32 0.0, %v463
  %v465 = vpop.f32.mrf.mxu0
  %466 = vmatprep.mubr.bf16.mxu0 %v203
  %467 = vmatmul.mubr.bf16.gmra.mxu0 %v202
  %v468 = vpop.f32.mrf.mxu0
  %v469 = vadd.f32 0.0, %v468
  %v470 = vpop.f32.mrf.mxu0
  %v471 = vpop.f32.mrf.mxu0
  %v472 = vadd.f32 0.0, %v471
  %v473 = vpop.f32.mrf.mxu0
  %474 = vmatprep.mubr.bf16.mxu0 %v205
  %475 = vmatmul.mubr.bf16.gmra.mxu0 %v204
  %v476 = vpop.f32.mrf.mxu0
  %v477 = vadd.f32 0.0, %v476
  %v478 = vpop.f32.mrf.mxu0
  %v479 = vpop.f32.mrf.mxu0
  %v480 = vadd.f32 0.0, %v479
  %v481 = vpop.f32.mrf.mxu0
  %482 = vmatprep.mubr.bf16.mxu0 %v207
  %483 = vmatmul.mubr.bf16.gmra.mxu0 %v206
  %v484 = vpop.f32.mrf.mxu0
  %v485 = vadd.f32 0.0, %v484
  %v486 = vpop.f32.mrf.mxu0
  %v487 = vpop.f32.mrf.mxu0
  %v488 = vadd.f32 0.0, %v487
  %v489 = vpop.f32.mrf.mxu0
  %490 = vmatprep.mubr.bf16.mxu0 %v209
  %491 = vmatmul.mubr.bf16.gmra.mxu0 %v208
  %v492 = vpop.f32.mrf.mxu0
  %v493 = vadd.f32 0.0, %v492
  %v494 = vpop.f32.mrf.mxu0
  %v495 = vpop.f32.mrf.mxu0
  %v496 = vadd.f32 0.0, %v495
  %v497 = vpop.f32.mrf.mxu0
  %498 = vdwg.mxu0
  %v499 = vpack.c.bf16 %v376, %v373
  %v500 = vpack.c.bf16 %v384, %v381
  %v501 = vpack.c.bf16 %v392, %v389
  %v502 = vpack.c.bf16 %v400, %v397
  %v503 = vpack.c.bf16 %v408, %v405
  %v504 = vpack.c.bf16 %v416, %v413
  %v505 = vpack.c.bf16 %v424, %v421
  %v506 = vpack.c.bf16 %v432, %v429
  %v507 = vpack.c.bf16 %v440, %v437
  %v508 = vpack.c.bf16 %v448, %v445
  %v509 = vpack.c.bf16 %v456, %v453
  %v510 = vpack.c.bf16 %v464, %v461
  %v511 = vpack.c.bf16 %v472, %v469
  %v512 = vpack.c.bf16 %v480, %v477
  %v513 = vpack.c.bf16 %v488, %v485
  %v514 = vpack.c.bf16 %v496, %v493
  %v515 = vld [vmem:[%s2] sm:$0xf]
  %v516 = vld [vmem:[%s2 + $0x4] sm:$0xf]
  %v517 = vld [vmem:[%s2 + $0x8] sm:$0xf]
  %v518 = vld [vmem:[%s2 + $0xc] sm:$0xf]
  %v519 = vld [vmem:[%s2 + $0x10] sm:$0xf]
  %v520 = vld [vmem:[%s2 + $0x14] sm:$0xf]
  %v521 = vld [vmem:[%s2 + $0x18] sm:$0xf]
  %v522 = vld [vmem:[%s2 + $0x1c] sm:$0xf]
  %v523 = vld [vmem:[%s2 + $0x20] sm:$0xf]
  %v524 = vld [vmem:[%s2 + $0x24] sm:$0xf]
  %v525 = vld [vmem:[%s2 + $0x28] sm:$0xf]
  %v526 = vld [vmem:[%s2 + $0x2c] sm:$0xf]
  %v527 = vld [vmem:[%s2 + $0x30] sm:$0xf]
  %v528 = vld [vmem:[%s2 + $0x34] sm:$0xf]
  %v529 = vld [vmem:[%s2 + $0x38] sm:$0xf]
  %v530 = vld [vmem:[%s2 + $0x3c] sm:$0xf]
  %v531 = vld [vmem:[%s3] sm:$0x1]
  %v533 = vlaneseq
  %v534 = vshrl.u32 %v533, 7
  %v535 = vsub.s32 0, %v534
  %v536 = vrot.slane %v531, %v535
  %v554 = vunpack.c.l.b16 %v515
  %v555 = vunpack.c.l.b16 %v516
  %v556 = vunpack.c.l.b16 %v517
  %v557 = vunpack.c.l.b16 %v518
  %v558 = vunpack.c.l.b16 %v519
  %v559 = vunpack.c.l.b16 %v520
  %v560 = vunpack.c.l.b16 %v521
  %v561 = vunpack.c.l.b16 %v522
  %v562 = vunpack.c.l.b16 %v523
  %v563 = vunpack.c.l.b16 %v524
  %v564 = vunpack.c.l.b16 %v525
  %v565 = vunpack.c.l.b16 %v526
  %v566 = vunpack.c.l.b16 %v527
  %v567 = vunpack.c.l.b16 %v528
  %v568 = vunpack.c.l.b16 %v529
  %v569 = vunpack.c.l.b16 %v530
  %v570 = vpack.c.b16 %v555, %v554
  %v571 = vpack.c.b16 %v557, %v556
  %v572 = vpack.c.b16 %v559, %v558
  %v573 = vpack.c.b16 %v561, %v560
  %v574 = vpack.c.b16 %v563, %v562
  %v575 = vpack.c.b16 %v565, %v564
  %v576 = vpack.c.b16 %v567, %v566
  %v577 = vpack.c.b16 %v569, %v568
  %586 = vmatprep.subr.bf16.mxu0 0
  %587 = vmatpush1.bf16.msra.mxu0 %v577
  %588 = vmatprep.subr.bf16.mxu0 0
  %589 = vmatpush1.bf16.msra.mxu0 %v576
  %590 = vmatprep.subr.bf16.mxu0 0
  %591 = vmatpush1.bf16.msra.mxu0 %v575
  %592 = vmatprep.subr.bf16.mxu0 0
  %593 = vmatpush1.bf16.msra.mxu0 %v574
  %594 = vmatprep.subr.bf16.mxu0 0
  %595 = vmatpush1.bf16.msra.mxu0 %v573
  %596 = vmatprep.subr.bf16.mxu0 0
  %597 = vmatpush1.bf16.msra.mxu0 %v572
  %598 = vmatprep.subr.bf16.mxu0 0
  %599 = vmatpush1.bf16.msra.mxu0 %v571
  %600 = vmatprep.subr.bf16.mxu0 0
  %601 = vmatpush1.bf16.msra.mxu0 %v570
  %602 = vmatprep.subr.bf16.mxu0 0
  %603 = vmatpush2.bf16.msra.mxu0 0
  %604 = vmatprep.subr.bf16.mxu0 0
  %605 = vmatpush2.bf16.msra.mxu0 0
  %606 = vmatprep.subr.bf16.mxu0 0
  %607 = vmatpush2.bf16.msra.mxu0 0
  %608 = vmatprep.subr.bf16.mxu0 0
  %609 = vmatpush2.bf16.msra.mxu0 0
  %610 = vmatprep.subr.bf16.mxu0 0
  %611 = vmatpush2.bf16.msra.mxu0 0
  %612 = vmatprep.subr.bf16.mxu0 0
  %613 = vmatpush2.bf16.msra.mxu0 0
  %614 = vmatprep.subr.bf16.mxu0 0
  %615 = vmatpush2.bf16.msra.mxu0 0
  %616 = vmatprep.subr.bf16.mxu0 0
  %617 = vmatpush2.bf16.msra.mxu0 0
  %618 = vmatprep.mubr.bf16.mxu0 0
  %619 = vmatmul.mubr.bf16.gmra.mxu0 %v499
  %v620 = vpop.f32.mrf.mxu0
  %v621 = vadd.f32 %v536, %v620
  %v622 = vpop.f32.mrf.mxu0
  %v623 = vpop.f32.mrf.mxu0
  %v624 = vadd.f32 %v536, %v623
  %v625 = vpop.f32.mrf.mxu0
  %626 = vmatprep.mubr.bf16.mxu0 0
  %627 = vmatmul.mubr.bf16.gmra.mxu0 %v500
  %v628 = vpop.f32.mrf.mxu0
  %v629 = vadd.f32 %v536, %v628
  %v630 = vpop.f32.mrf.mxu0
  %v631 = vpop.f32.mrf.mxu0
  %v632 = vadd.f32 %v536, %v631
  %v633 = vpop.f32.mrf.mxu0
  %634 = vmatprep.mubr.bf16.mxu0 0
  %635 = vmatmul.mubr.bf16.gmra.mxu0 %v501
  %v636 = vpop.f32.mrf.mxu0
  %v637 = vadd.f32 %v536, %v636
  %v638 = vpop.f32.mrf.mxu0
  %v639 = vpop.f32.mrf.mxu0
  %v640 = vadd.f32 %v536, %v639
  %v641 = vpop.f32.mrf.mxu0
  %642 = vmatprep.mubr.bf16.mxu0 0
  %643 = vmatmul.mubr.bf16.gmra.mxu0 %v502
  %v644 = vpop.f32.mrf.mxu0
  %v645 = vadd.f32 %v536, %v644
  %v646 = vpop.f32.mrf.mxu0
  %v647 = vpop.f32.mrf.mxu0
  %v648 = vadd.f32 %v536, %v647
  %v649 = vpop.f32.mrf.mxu0
  %650 = vmatprep.mubr.bf16.mxu0 0
  %651 = vmatmul.mubr.bf16.gmra.mxu0 %v503
  %v652 = vpop.f32.mrf.mxu0
  %v653 = vadd.f32 %v536, %v652
  %v654 = vpop.f32.mrf.mxu0
  %v655 = vpop.f32.mrf.mxu0
  %v656 = vadd.f32 %v536, %v655
  %v657 = vpop.f32.mrf.mxu0
  %658 = vmatprep.mubr.bf16.mxu0 0
  %659 = vmatmul.mubr.bf16.gmra.mxu0 %v504
  %v660 = vpop.f32.mrf.mxu0
  %v661 = vadd.f32 %v536, %v660
  %v662 = vpop.f32.mrf.mxu0
  %v663 = vpop.f32.mrf.mxu0
  %v664 = vadd.f32 %v536, %v663
  %v665 = vpop.f32.mrf.mxu0
  %666 = vmatprep.mubr.bf16.mxu0 0
  %667 = vmatmul.mubr.bf16.gmra.mxu0 %v505
  %v668 = vpop.f32.mrf.mxu0
  %v669 = vadd.f32 %v536, %v668
  %v670 = vpop.f32.mrf.mxu0
  %v671 = vpop.f32.mrf.mxu0
  %v672 = vadd.f32 %v536, %v671
  %v673 = vpop.f32.mrf.mxu0
  %674 = vmatprep.mubr.bf16.mxu0 0
  %675 = vmatmul.mubr.bf16.gmra.mxu0 %v506
  %v676 = vpop.f32.mrf.mxu0
  %v677 = vadd.f32 %v536, %v676
  %v678 = vpop.f32.mrf.mxu0
  %v679 = vpop.f32.mrf.mxu0
  %v680 = vadd.f32 %v536, %v679
  %v681 = vpop.f32.mrf.mxu0
  %682 = vmatprep.mubr.bf16.mxu0 0
  %683 = vmatmul.mubr.bf16.gmra.mxu0 %v507
  %v684 = vpop.f32.mrf.mxu0
  %v685 = vadd.f32 %v536, %v684
  %v686 = vpop.f32.mrf.mxu0
  %v687 = vpop.f32.mrf.mxu0
  %v688 = vadd.f32 %v536, %v687
  %v689 = vpop.f32.mrf.mxu0
  %690 = vmatprep.mubr.bf16.mxu0 0
  %691 = vmatmul.mubr.bf16.gmra.mxu0 %v508
  %v692 = vpop.f32.mrf.mxu0
  %v693 = vadd.f32 %v536, %v692
  %v694 = vpop.f32.mrf.mxu0
  %v695 = vpop.f32.mrf.mxu0
  %v696 = vadd.f32 %v536, %v695
  %v697 = vpop.f32.mrf.mxu0
  %698 = vmatprep.mubr.bf16.mxu0 0
  %699 = vmatmul.mubr.bf16.gmra.mxu0 %v509
  %v700 = vpop.f32.mrf.mxu0
  %v701 = vadd.f32 %v536, %v700
  %v702 = vpop.f32.mrf.mxu0
  %v703 = vpop.f32.mrf.mxu0
  %v704 = vadd.f32 %v536, %v703
  %v705 = vpop.f32.mrf.mxu0
  %706 = vmatprep.mubr.bf16.mxu0 0
  %707 = vmatmul.mubr.bf16.gmra.mxu0 %v510
  %v708 = vpop.f32.mrf.mxu0
  %v709 = vadd.f32 %v536, %v708
  %v710 = vpop.f32.mrf.mxu0
  %v711 = vpop.f32.mrf.mxu0
  %v712 = vadd.f32 %v536, %v711
  %v713 = vpop.f32.mrf.mxu0
  %714 = vmatprep.mubr.bf16.mxu0 0
  %715 = vmatmul.mubr.bf16.gmra.mxu0 %v511
  %v716 = vpop.f32.mrf.mxu0
  %v717 = vadd.f32 %v536, %v716
  %v718 = vpop.f32.mrf.mxu0
  %v719 = vpop.f32.mrf.mxu0
  %v720 = vadd.f32 %v536, %v719
  %v721 = vpop.f32.mrf.mxu0
  %722 = vmatprep.mubr.bf16.mxu0 0
  %723 = vmatmul.mubr.bf16.gmra.mxu0 %v512
  %v724 = vpop.f32.mrf.mxu0
  %v725 = vadd.f32 %v536, %v724
  %v726 = vpop.f32.mrf.mxu0
  %v727 = vpop.f32.mrf.mxu0
  %v728 = vadd.f32 %v536, %v727
  %v729 = vpop.f32.mrf.mxu0
  %730 = vmatprep.mubr.bf16.mxu0 0
  %731 = vmatmul.mubr.bf16.gmra.mxu0 %v513
  %v732 = vpop.f32.mrf.mxu0
  %v733 = vadd.f32 %v536, %v732
  %v734 = vpop.f32.mrf.mxu0
  %v735 = vpop.f32.mrf.mxu0
  %v736 = vadd.f32 %v536, %v735
  %v737 = vpop.f32.mrf.mxu0
  %738 = vmatprep.mubr.bf16.mxu0 0
  %739 = vmatmul.mubr.bf16.gmra.mxu0 %v514
  %v740 = vpop.f32.mrf.mxu0
  %v741 = vadd.f32 %v536, %v740
  %v742 = vpop.f32.mrf.mxu0
  %v743 = vpop.f32.mrf.mxu0
  %v744 = vadd.f32 %v536, %v743
  %v745 = vpop.f32.mrf.mxu0
  %746 = vdwg.mxu0
  %v747 = vmax.f32 %v621, 0.0
  %v748 = vmax.f32 %v624, 0.0
  %v749 = vmax.f32 %v629, 0.0
  %v750 = vmax.f32 %v632, 0.0
  %v751 = vmax.f32 %v637, 0.0
  %v752 = vmax.f32 %v640, 0.0
  %v753 = vmax.f32 %v645, 0.0
  %v754 = vmax.f32 %v648, 0.0
  %v755 = vmax.f32 %v653, 0.0
  %v756 = vmax.f32 %v656, 0.0
  %v757 = vmax.f32 %v661, 0.0
  %v758 = vmax.f32 %v664, 0.0
  %v759 = vmax.f32 %v669, 0.0
  %v760 = vmax.f32 %v672, 0.0
  %v761 = vmax.f32 %v677, 0.0
  %v762 = vmax.f32 %v680, 0.0
  %v763 = vmax.f32 %v685, 0.0
  %v764 = vmax.f32 %v688, 0.0
  %v765 = vmax.f32 %v693, 0.0
  %v766 = vmax.f32 %v696, 0.0
  %v767 = vmax.f32 %v701, 0.0
  %v768 = vmax.f32 %v704, 0.0
  %v769 = vmax.f32 %v709, 0.0
  %v770 = vmax.f32 %v712, 0.0
  %v771 = vmax.f32 %v717, 0.0
  %v772 = vmax.f32 %v720, 0.0
  %v773 = vmax.f32 %v725, 0.0
  %v774 = vmax.f32 %v728, 0.0
  %v775 = vmax.f32 %v733, 0.0
  %v776 = vmax.f32 %v736, 0.0
  %v777 = vmax.f32 %v741, 0.0
  %v778 = vmax.f32 %v744, 0.0
  %v779 = vpack.c.bf16 %v748, %v747
  %v780 = vpack.c.bf16 %v750, %v749
  %v781 = vpack.c.bf16 %v752, %v751
  %v782 = vpack.c.bf16 %v754, %v753
  %v783 = vpack.c.bf16 %v756, %v755
  %v784 = vpack.c.bf16 %v758, %v757
  %v785 = vpack.c.bf16 %v760, %v759
  %v786 = vpack.c.bf16 %v762, %v761
  %v787 = vpack.c.bf16 %v764, %v763
  %v788 = vpack.c.bf16 %v766, %v765
  %v789 = vpack.c.bf16 %v768, %v767
  %v790 = vpack.c.bf16 %v770, %v769
  %v791 = vpack.c.bf16 %v772, %v771
  %v792 = vpack.c.bf16 %v774, %v773
  %v793 = vpack.c.bf16 %v776, %v775
  %v794 = vpack.c.bf16 %v778, %v777
  %v811 = vunpack.c.l.b16 %v779
  %v812 = vunpack.c.h.b16 %v779
  %v813 = vunpack.c.l.b16 %v780
  %v814 = vunpack.c.h.b16 %v780
  %v815 = vunpack.c.l.b16 %v781
  %v816 = vunpack.c.h.b16 %v781
  %v817 = vunpack.c.l.b16 %v782
  %v818 = vunpack.c.h.b16 %v782
  %v819 = vunpack.c.l.b16 %v783
  %v820 = vunpack.c.h.b16 %v783
  %v821 = vunpack.c.l.b16 %v784
  %v822 = vunpack.c.h.b16 %v784
  %v823 = vunpack.c.l.b16 %v785
  %v824 = vunpack.c.h.b16 %v785
  %v825 = vunpack.c.l.b16 %v786
  %v826 = vunpack.c.h.b16 %v786
  %v827 = vunpack.c.l.b16 %v787
  %v828 = vunpack.c.h.b16 %v787
  %v829 = vunpack.c.l.b16 %v788
  %v830 = vunpack.c.h.b16 %v788
  %v831 = vunpack.c.l.b16 %v789
  %v832 = vunpack.c.h.b16 %v789
  %v833 = vunpack.c.l.b16 %v790
  %v834 = vunpack.c.h.b16 %v790
  %v835 = vunpack.c.l.b16 %v791
  %v836 = vunpack.c.h.b16 %v791
  %v837 = vunpack.c.l.b16 %v792
  %v838 = vunpack.c.h.b16 %v792
  %v839 = vunpack.c.l.b16 %v793
  %v840 = vunpack.c.h.b16 %v793
  %v841 = vunpack.c.l.b16 %v794
  %v842 = vunpack.c.h.b16 %v794
  %v843 = vpack.c.b16 %v811, %v811
  %v844 = vpack.c.b16 %v812, %v812
  %v845 = vpack.c.b16 %v813, %v813
  %v846 = vpack.c.b16 %v814, %v814
  %v847 = vpack.c.b16 %v815, %v815
  %v848 = vpack.c.b16 %v816, %v816
  %v849 = vpack.c.b16 %v817, %v817
  %v850 = vpack.c.b16 %v818, %v818
  %v851 = vpack.c.b16 %v819, %v819
  %v852 = vpack.c.b16 %v820, %v820
  %v853 = vpack.c.b16 %v821, %v821
  %v854 = vpack.c.b16 %v822, %v822
  %v855 = vpack.c.b16 %v823, %v823
  %v856 = vpack.c.b16 %v824, %v824
  %v857 = vpack.c.b16 %v825, %v825
  %v858 = vpack.c.b16 %v826, %v826
  %v859 = vpack.c.b16 %v827, %v827
  %v860 = vpack.c.b16 %v828, %v828
  %v861 = vpack.c.b16 %v829, %v829
  %v862 = vpack.c.b16 %v830, %v830
  %v863 = vpack.c.b16 %v831, %v831
  %v864 = vpack.c.b16 %v832, %v832
  %v865 = vpack.c.b16 %v833, %v833
  %v866 = vpack.c.b16 %v834, %v834
  %v867 = vpack.c.b16 %v835, %v835
  %v868 = vpack.c.b16 %v836, %v836
  %v869 = vpack.c.b16 %v837, %v837
  %v870 = vpack.c.b16 %v838, %v838
  %v871 = vpack.c.b16 %v839, %v839
  %v872 = vpack.c.b16 %v840, %v840
  %v873 = vpack.c.b16 %v841, %v841
  %v874 = vpack.c.b16 %v842, %v842
  %907 = vst [vmem:[%s4] sm:$0xf] %v843
  %908 = vst [vmem:[%s4 + $0x4] sm:$0xf] %v844
  %909 = vst [vmem:[%s4 + $0x8] sm:$0xf] %v845
  %910 = vst [vmem:[%s4 + $0xc] sm:$0xf] %v846
  %911 = vst [vmem:[%s4 + $0x10] sm:$0xf] %v847
  %912 = vst [vmem:[%s4 + $0x14] sm:$0xf] %v848
  %913 = vst [vmem:[%s4 + $0x18] sm:$0xf] %v849
  %914 = vst [vmem:[%s4 + $0x1c] sm:$0xf] %v850
  %915 = vst [vmem:[%s4 + $0x20] sm:$0xf] %v851
  %916 = vst [vmem:[%s4 + $0x24] sm:$0xf] %v852
  %917 = vst [vmem:[%s4 + $0x28] sm:$0xf] %v853
  %918 = vst [vmem:[%s4 + $0x2c] sm:$0xf] %v854
  %919 = vst [vmem:[%s4 + $0x30] sm:$0xf] %v855
  %920 = vst [vmem:[%s4 + $0x34] sm:$0xf] %v856
  %921 = vst [vmem:[%s4 + $0x38] sm:$0xf] %v857
  %922 = vst [vmem:[%s4 + $0x3c] sm:$0xf] %v858
  %923 = vst [vmem:[%s4 + $0x40] sm:$0xf] %v859
  %924 = vst [vmem:[%s4 + $0x44] sm:$0xf] %v860
  %925 = vst [vmem:[%s4 + $0x48] sm:$0xf] %v861
  %926 = vst [vmem:[%s4 + $0x4c] sm:$0xf] %v862
  %927 = vst [vmem:[%s4 + $0x50] sm:$0xf] %v863
  %928 = vst [vmem:[%s4 + $0x54] sm:$0xf] %v864
  %929 = vst [vmem:[%s4 + $0x58] sm:$0xf] %v865
  %930 = vst [vmem:[%s4 + $0x5c] sm:$0xf] %v866
  %931 = vst [vmem:[%s4 + $0x60] sm:$0xf] %v867
  %932 = vst [vmem:[%s4 + $0x64] sm:$0xf] %v868
  %933 = vst [vmem:[%s4 + $0x68] sm:$0xf] %v869
  %934 = vst [vmem:[%s4 + $0x6c] sm:$0xf] %v870
  %935 = vst [vmem:[%s4 + $0x70] sm:$0xf] %v871
  %936 = vst [vmem:[%s4 + $0x74] sm:$0xf] %v872
  %937 = vst [vmem:[%s4 + $0x78] sm:$0xf] %v873
  %938 = vst [vmem:[%s4 + $0x7c] sm:$0xf] %v874
  // Predicated region
  $region18: #{graph_encoder_forward.2} parent=0 // pred_check
    _
  $region19: #{graph_encoder_forward.2} parent=0 // pred_check_branch
    %940 = sbr.rel (0) target = $region21
  $region20: #{graph_encoder_forward.2} parent=0 // pred_region
    _
  $region21: #{graph_encoder_forward.2} parent=0 // pred_fallthru
    _
  // Predicated region
  $region22: #{graph_encoder_forward.2} parent=0 // pred_check
    _
  $region23: #{graph_encoder_forward.2} parent=0 // pred_check_branch
    %942 = sbr.rel (0) target = $region25
  $region24: #{graph_encoder_forward.2} parent=0 // pred_region
    _
  $region25: #{graph_encoder_forward.2} parent=0 // pred_fallthru
    _

</llo_original>
